<compile_context>
chip_gen: v6e
topology: v6e:2x2x1
jax: 0.10.0
libtpu: 0.0.40
codegen_flags: <defaults>
</compile_context>

<pallas_src>
import functools

import jax
import jax.numpy as jnp
import numpy as np
from jax.experimental import pallas as pl
from jax.experimental.pallas import tpu as pltpu


# ------------------------------- fused kernel -------------------------------
# One grid step == one batch element.

def _pp_batch_kernel(x_enc_ref, x_dec_ref, dt_ref,
                     w_enc_ref, w_agg_f_ref, w_agg_b_ref, b_agg_ref,
                     w_dec_x_ref, w_dec_z_ref,
                     w_ih_s_ref, w_ih_z_ref, hrows_ref,
                     w_io_ref, b_io_ref,
                     latent_ref, states_ref, intens_ref,
                     *, L, M):
    f32 = jnp.float32
    bf16 = jnp.bfloat16

    # ---- encoder, ctx rows only: (2, E+2) @ (E+2, H); rows = [fwd, bwd] ----
    h = jnp.tanh(jnp.dot(x_enc_ref[0], w_enc_ref[...],
                         preferred_element_type=f32))              # (2, H)
    h_f = h[0:1, :].astype(bf16)
    h_b = h[1:2, :].astype(bf16)

    # ---- aggregator: single matmul produces [mu | sigma_pre] ----
    ms = (jnp.dot(h_f, w_agg_f_ref[...], preferred_element_type=f32)
          + jnp.dot(h_b, w_agg_b_ref[...], preferred_element_type=f32)
          + b_agg_ref[...])                                        # (1, 2L)
    mu = ms[:, :L]
    latent_ref[0, :, :L] = mu                                      # direct slice writes
    latent_ref[0, :, L:] = jax.nn.softplus(ms[:, L:])
    z = mu.astype(bf16)                                            # eval-mode latent (1, L)

    # ---- decoder.get_states: s = tanh(x_dec @ W + z @ W_z)  (bias folded) ----
    z_dec = jnp.dot(z, w_dec_z_ref[...], preferred_element_type=f32)        # (1, H)
    s_vals = jnp.tanh(jnp.dot(x_dec_ref[0], w_dec_x_ref[...],
                              preferred_element_type=f32)
                      + z_dec)                                     # (T, H) VPU broadcast add
    states_ref[0] = s_vals

    # ---- decoder.get_intensity: tgt rows (dt = 0) + sample rows ----
    z_int = jnp.dot(z, w_ih_z_ref[...], preferred_element_type=f32)         # (1, H)
    base = (jnp.dot(s_vals.astype(bf16), w_ih_s_ref[...],
                    preferred_element_type=f32)
            + z_int + hrows_ref[0:1, :])                           # (T, H)  [+ b_ih]
    u_tgt = jnp.tanh(base)
    u_smp = jnp.tanh(base + dt_ref[0] * hrows_ref[1:2, :])         # dt (T,1) * w_dt (1,H)
    u_all = jnp.concatenate([u_tgt, u_smp], axis=0).astype(bf16)   # (2T, H) sublane stack

    pre = (jnp.dot(u_all, w_io_ref[...], preferred_element_type=f32)
           + b_io_ref[...])                                        # (2T, M)
    lam = jax.nn.softplus(pre)
    # numerically stable log(softplus(x))
    log_lam = jnp.where(pre < -20.0, pre, jnp.log(jnp.maximum(lam, 1e-30)))
    intens_ref[0, :, :M] = log_lam
    intens_ref[0, :, M:] = jnp.sum(lam, axis=-1, keepdims=True)    # total intensity


# ------------------------------- model params -------------------------------

def init_params(key, *, num_marks, mark_emb, hidden, latent):
    ks = jax.random.split(key, 8)
    s = 0.1
    p = {
        "mark_embedding": s * jax.random.normal(ks[0], (num_marks, mark_emb)),
        # encoder rows: [emb(E); t(1)]
        "W_enc": s * jax.random.normal(ks[1], (mark_emb + 1, hidden)),
        "b_enc": jnp.zeros((1, hidden)),
        # aggregator rows: [fwd(H); bwd(H)]
        "W_mu": s * jax.random.normal(ks[2], (2 * hidden, latent)),
        "b_mu": jnp.zeros((1, latent)),
        "W_sig": s * jax.random.normal(ks[3], (2 * hidden, latent)),
        "b_sig": jnp.zeros((1, latent)),
        # decoder state rows: [emb(E); z(L); t(1)]
        "W_dec": s * jax.random.normal(ks[4], (mark_emb + latent + 1, hidden)),
        "b_dec": jnp.zeros((1, hidden)),
        # intensity hidden rows: [state(H); z(L); dt(1)]
        "W_int_h": s * jax.random.normal(ks[5], (hidden + latent + 1, hidden)),
        "b_int_h": jnp.zeros((1, hidden)),
        "W_int_o": s * jax.random.normal(ks[6], (hidden, num_marks)),
        "b_int_o": jnp.zeros((1, num_marks)),
        # PPModel._p_z_params: two frozen zero tensors of shape (1, latent)
        "p_z_loc": jnp.zeros((1, latent)),
        "p_z_raw_scale": jnp.zeros((1, latent)),
    }
    return jax.tree_util.tree_map(lambda x: x.astype(jnp.float32), p)


def get_prior_params(params):
    # matches PPModel.get_prior_params: (loc, softmax(raw) * latent_size)
    raw = params["p_z_raw_scale"]
    return params["p_z_loc"], jax.nn.softmax(raw, axis=-1) * raw.shape[-1]


# ------------------------------- forward pass --------------------------------

@jax.jit
def pp_model_forward(params, ref_marks, ref_timestamps, ref_marks_bwd,
                     ref_timestamps_bwd, tgt_marks, tgt_timestamps,
                     context_lengths, sample_timestamps=None):
    f32, bf16 = jnp.float32, jnp.bfloat16
    B, S = ref_marks.shape
    _, T = tgt_marks.shape
    emb_tab = params["mark_embedding"]
    _, E = emb_tab.shape
    H = params["W_enc"].shape[1]
    L = params["W_mu"].shape[1]
    M = params["W_int_o"].shape[1]
    EP = E + 2

    have_samples = sample_timestamps is not None
    samp_t = sample_timestamps if have_samples else tgt_timestamps

    # --- encoder inputs gathered at context_lengths (the only rows the aggregator reads) ---
    # TODO(synk): confirm context_lengths is the selected index (vs. length-1) in the
    # original encoder/aggregator; clamped here so OOB indices cannot silently zero out.
    bidx = jnp.arange(B)
    ctx = jnp.clip(context_lengths.reshape(B).astype(jnp.int32), 0, S - 1)
    ones_b = jnp.ones((B, 1), f32)

    def enc_feats(marks, times):
        return jnp.concatenate(
            [emb_tab[marks[bidx, ctx]],
             times[bidx, ctx].astype(f32)[:, None],
             ones_b], axis=1)                                       # (B, E+2)

    x_enc = jnp.stack([enc_feats(ref_marks, ref_timestamps),
                       enc_feats(ref_marks_bwd, ref_timestamps_bwd)],
                      axis=1).astype(bf16)                          # (B, 2, E+2)

    # --- decoder features: [emb(tgt_mark), tgt_t, 1] ---
    x_dec = jnp.concatenate(
        [emb_tab[tgt_marks], tgt_timestamps[..., None].astype(f32),
         jnp.ones((B, T, 1), f32)], axis=-1).astype(bf16)           # (B, T, E+2)
    dt_smp = (samp_t - tgt_timestamps)[..., None].astype(f32)       # (B, T, 1)

    # --- pre-split, tile-aligned weight operands; bias rows folded into matmuls ---
    w_enc = jnp.concatenate([params["W_enc"], params["b_enc"]], axis=0).astype(bf16)   # (E+2,H)
    W_mu, W_sig = params["W_mu"], params["W_sig"]
    w_agg_f = jnp.concatenate([W_mu[:H], W_sig[:H]], axis=1).astype(bf16)               # (H,2L)
    w_agg_b = jnp.concatenate([W_mu[H:], W_sig[H:]], axis=1).astype(bf16)               # (H,2L)
    b_agg = jnp.concatenate([params["b_mu"], params["b_sig"]], axis=1)                  # (1,2L) f32
    W_dec = params["W_dec"]
    w_dec_x = jnp.concatenate([W_dec[:E], W_dec[E + L:], params["b_dec"]],
                              axis=0).astype(bf16)                                      # (E+2,H)
    w_dec_z = W_dec[E:E + L].astype(bf16)                                               # (L,H)
    W_ih = params["W_int_h"]
    w_ih_s = W_ih[:H].astype(bf16)                                                      # (H,H)
    w_ih_z = W_ih[H:H + L].astype(bf16)                                                 # (L,H)
    hrows = jnp.concatenate([params["b_int_h"], W_ih[H + L:]], axis=0)                  # (2,H) f32
    w_io = params["W_int_o"].astype(bf16)                                               # (H,M)
    b_io = params["b_int_o"]                                                            # (1,M) f32

    operands = (x_enc, x_dec, dt_smp, w_enc, w_agg_f, w_agg_b, b_agg,
                w_dec_x, w_dec_z, w_ih_s, w_ih_z, hrows, w_io, b_io)

    out_shape = (
        jax.ShapeDtypeStruct((B, 1, 2 * L), f32),        # [mu | sigma]
        jax.ShapeDtypeStruct((B, T, H), f32),            # state_values
        jax.ShapeDtypeStruct((B, 2 * T, M + 1), f32),    # [log_lambda | total]; tgt rows then sample rows
    )

    batch_map = lambda b: (b, 0, 0)
    const_map = lambda b: (0, 0)
    in_specs = [
        pl.BlockSpec((1, 2, EP), batch_map),             # x_enc
        pl.BlockSpec((1, T, EP), batch_map),             # x_dec
        pl.BlockSpec((1, T, 1), batch_map),              # dt_smp
        pl.BlockSpec((EP, H), const_map),                # W_enc (+ w_t, b folded)
        pl.BlockSpec((H, 2 * L), const_map),             # W_agg_fwd  [W_mu | W_sig]
        pl.BlockSpec((H, 2 * L), const_map),             # W_agg_bwd
        pl.BlockSpec((1, 2 * L), const_map),             # [b_mu | b_sig]
        pl.BlockSpec((EP, H), const_map),                # W_dec_x (+ w_t, b folded)
        pl.BlockSpec((L, H), const_map),                 # W_dec_z
        pl.BlockSpec((H, H), const_map),                 # W_ih_state
        pl.BlockSpec((L, H), const_map),                 # W_ih_z
        pl.BlockSpec((2, H), const_map),                 # [b_ih ; w_dt]
        pl.BlockSpec((H, M), const_map),                 # W_io
        pl.BlockSpec((1, M), const_map),                 # b_io
    ]
    out_specs = (
        pl.BlockSpec((1, 1, 2 * L), batch_map),
        pl.BlockSpec((1, T, H), batch_map),
        pl.BlockSpec((1, 2 * T, M + 1), batch_map),
    )

    flops = 2 * B * (2 * EP * H + 2 * H * 2 * L + T * EP * H + L * H
                     + T * H * H + L * H + 2 * T * H * M)
    transcendentals = B * (2 * H + L + 3 * T * H + 4 * T * M)
    in_bytes = sum(int(np.prod(a.shape)) * a.dtype.itemsize for a in operands)
    out_bytes = sum(int(np.prod(s.shape)) * 4 for s in out_shape)
    cost = pl.CostEstimate(flops=int(flops), transcendentals=int(transcendentals),
                           bytes_accessed=int(in_bytes + out_bytes))

    latent, states, intens = pl.pallas_call(
        functools.partial(_pp_batch_kernel, L=L, M=M),
        grid=(B,),
        in_specs=in_specs,
        out_specs=out_specs,
        out_shape=out_shape,
        compiler_params=pltpu.CompilerParams(
            dimension_semantics=("parallel",),
            vmem_limit_bytes=32 * 1024 * 1024),
        cost_estimate=cost,
    )(*operands)

    mu = latent[:, 0, :L]
    sigma = latent[:, 0, L:]
    p_loc, p_scale = get_prior_params(params)

    log_lam_tgt = intens[:, :T, :M]
    log_mark = jnp.take_along_axis(
        log_lam_tgt, tgt_marks[..., None].astype(jnp.int32), axis=-1)[..., 0]

    return_dict = {
        "latent_state": mu,
        "q_z_x": {"loc": mu, "scale": sigma},
        "p_z": {"loc": p_loc, "scale": p_scale},
        "state_dict": {"state_values": states, "state_times": tgt_timestamps},
        "tgt_intensities": {
            "all_log_mark_intensities": log_lam_tgt,
            "total_intensity": intens[:, :T, M],
            "log_mark_intensity": log_mark,
        },
    }
    if have_samples:
        return_dict["sample_intensities"] = {
            "all_log_mark_intensities": intens[:, T:, :M],
            "total_intensity": intens[:, T:, M],
        }
    return return_dict


# -------------------------- pure-JAX reference (check) -----------------------

def _reference_forward(params, ref_marks, ref_t, ref_marks_bwd, ref_t_bwd,
                       tgt_marks, tgt_t, ctx, samp_t):
    emb_tab = params["mark_embedding"]
    NM, E = emb_tab.shape
    H = params["W_enc"].shape[1]
    L = params["W_mu"].shape[1]
    B, S = ref_marks.shape

    def enc(m, t):
        w = params["W_enc"]
        return jnp.tanh(emb_tab[m] @ w[:E] + t[..., None] * w[E:E + 1]
                        + params["b_enc"])

    h_f, h_b = enc(ref_marks, ref_t), enc(ref_marks_bwd, ref_t_bwd)
    idx = ctx.reshape(B)
    h_sel_f = h_f[jnp.arange(B), idx]
    h_sel_b = h_b[jnp.arange(B), idx]
    wmu, wsig = params["W_mu"], params["W_sig"]
    mu = h_sel_f @ wmu[:H] + h_sel_b @ wmu[H:] + params["b_mu"]
    sigma = jax.nn.softplus(h_sel_f @ wsig[:H] + h_sel_b @ wsig[H:] + params["b_sig"])
    z = mu

    wdec = params["W_dec"]
    s_vals = jnp.tanh(emb_tab[tgt_marks] @ wdec[:E]
                      + (z @ wdec[E:E + L])[:, None, :]
                      + tgt_t[..., None] * wdec[E + L:E + L + 1]
                      + params["b_dec"])

    wih = params["W_int_h"]
    base = (s_vals @ wih[:H] + (z @ wih[H:H + L])[:, None, :] + params["b_int_h"])
    u_tgt = jnp.tanh(base)
    u_smp = jnp.tanh(base + (samp_t - tgt_t)[..., None] * wih[H + L:H + L + 1])

    def head(u):
        pre = u @ params["W_int_o"] + params["b_int_o"]
        lam = jax.nn.softplus(pre)
        log_lam = jnp.where(pre < -20.0, pre, jnp.log(jnp.maximum(lam, 1e-30)))
        return log_lam, jnp.sum(lam, -1)

    ll_t, tot_t = head(u_tgt)
    ll_s, tot_s = head(u_smp)
    log_mark = jnp.take_along_axis(ll_t, tgt_marks[..., None], axis=-1)[..., 0]
    return {"mu": mu, "states": s_vals, "tgt_log": ll_t, "tgt_total": tot_t,
            "tgt_logmark": log_mark, "smp_total": tot_s}


# ---------------------------------- main ------------------------------------

if __name__ == "__main__":
    B, S, T = 2, 8, 8
    NUM_MARKS, MARK_EMB, HIDDEN, LATENT = 6, 8, 32, 16

    key = jax.random.PRNGKey(0)
    k_par, k1, k2, k3, k4, k5 = jax.random.split(key, 6)

    params = init_params(k_par, num_marks=NUM_MARKS, mark_emb=MARK_EMB,
                         hidden=HIDDEN, latent=LATENT)

    ref_marks = jax.random.randint(k1, (B, S), 0, NUM_MARKS, dtype=jnp.int32)
    ref_timestamps = jnp.sort(jax.random.uniform(k2, (B, S)) * 5.0, axis=-1)
    ref_marks_bwd = ref_marks[:, ::-1]
    ref_timestamps_bwd = ref_timestamps[:, ::-1]

    tgt_marks = jax.random.randint(k3, (B, T), 0, NUM_MARKS, dtype=jnp.int32)
    tgt_timestamps = jnp.sort(jax.random.uniform(k4, (B, T)) * 5.0, axis=-1)
    sample_timestamps = jnp.sort(jax.random.uniform(k5, (B, T)) * 5.0, axis=-1)

    context_lengths = jnp.full((B, 1), S - 1, dtype=jnp.int32)

    out = pp_model_forward(params, ref_marks, ref_timestamps, ref_marks_bwd,
                           ref_timestamps_bwd, tgt_marks, tgt_timestamps,
                           context_lengths, sample_timestamps)
    out = jax.block_until_ready(out)

    # shape / positivity sanity checks
    assert out["latent_state"].shape == (B, LATENT)
    assert out["state_dict"]["state_values"].shape == (B, T, HIDDEN)
    assert out["tgt_intensities"]["all_log_mark_intensities"].shape == (B, T, NUM_MARKS)
    assert out["tgt_intensities"]["log_mark_intensity"].shape == (B, T)
    assert out["sample_intensities"]["total_intensity"].shape == (B, T)
    assert bool(jnp.all(out["sample_intensities"]["total_intensity"] > 0.0))
    assert bool(jnp.all(out["q_z_x"]["scale"] > 0.0))

    # numerical check vs. pure-JAX f32 reference (kernel uses bf16 MXU operands)
    ref = _reference_forward(params, ref_marks, ref_timestamps, ref_marks_bwd,
                             ref_timestamps_bwd, tgt_marks, tgt_timestamps,
                             context_lengths, sample_timestamps)
    tol = dict(rtol=4e-2, atol=4e-2)
    np.testing.assert_allclose(out["latent_state"], ref["mu"], **tol)
    np.testing.assert_allclose(out["state_dict"]["state_values"], ref["states"], **tol)
    np.testing.assert_allclose(out["tgt_intensities"]["all_log_mark_intensities"],
                               ref["tgt_log"], **tol)
    np.testing.assert_allclose(out["tgt_intensities"]["total_intensity"],
                               ref["tgt_total"], **tol)
    np.testing.assert_allclose(out["tgt_intensities"]["log_mark_intensity"],
                               ref["tgt_logmark"], **tol)
    np.testing.assert_allclose(out["sample_intensities"]["total_intensity"],
                               ref["smp_total"], **tol)

    # TODO(synk): sample_points() rejection-sampling loop and top_k_top_p_filtering
    # are host-side data-dependent control flow and are not expressible as a Pallas kernel.
    print("KERNEL_OK")
</pallas_src>

<mosaic_0001>
module attributes {stable_mosaic.version = 11 : i64} {
  func.func @_pp_batch_kernel(%arg0: i32, %arg1: memref<1x2x10xbf16, #tpu.memory_space<vmem>>, %arg2: memref<1x8x10xbf16, #tpu.memory_space<vmem>>, %arg3: memref<1x8x1xf32, #tpu.memory_space<vmem>>, %arg4: memref<10x32xbf16, #tpu.memory_space<vmem>>, %arg5: memref<32x32xbf16, #tpu.memory_space<vmem>>, %arg6: memref<32x32xbf16, #tpu.memory_space<vmem>>, %arg7: memref<1x32xf32, #tpu.memory_space<vmem>>, %arg8: memref<10x32xbf16, #tpu.memory_space<vmem>>, %arg9: memref<16x32xbf16, #tpu.memory_space<vmem>>, %arg10: memref<32x32xbf16, #tpu.memory_space<vmem>>, %arg11: memref<16x32xbf16, #tpu.memory_space<vmem>>, %arg12: memref<2x32xf32, #tpu.memory_space<vmem>>, %arg13: memref<32x6xbf16, #tpu.memory_space<vmem>>, %arg14: memref<1x6xf32, #tpu.memory_space<vmem>>, %arg15: memref<1x1x32xf32, #tpu.memory_space<vmem>>, %arg16: memref<1x8x32xf32, #tpu.memory_space<vmem>>, %arg17: memref<1x16x7xf32, #tpu.memory_space<vmem>>) attributes {dimension_semantics = [#tpu.dimension_semantics<parallel>], iteration_bounds = array<i64: 2>, scalar_prefetch = 0 : i64, scratch_operands = 0 : i64, tpu.core_type = #tpu.core_type<tc>, window_params = [{transform_indices = @transform_0, window_bounds = array<i64: 1, 2, 10>}, {transform_indices = @transform_1, window_bounds = array<i64: 1, 8, 10>}, {transform_indices = @transform_2, window_bounds = array<i64: 1, 8, 1>}, {pipeline_mode = #tpu.pipeline_mode<synchronous>, transform_indices = @transform_3, window_bounds = array<i64: 10, 32>}, {pipeline_mode = #tpu.pipeline_mode<synchronous>, transform_indices = @transform_4, window_bounds = array<i64: 32, 32>}, {pipeline_mode = #tpu.pipeline_mode<synchronous>, transform_indices = @transform_5, window_bounds = array<i64: 32, 32>}, {pipeline_mode = #tpu.pipeline_mode<synchronous>, transform_indices = @transform_6, window_bounds = array<i64: 1, 32>}, {pipeline_mode = #tpu.pipeline_mode<synchronous>, transform_indices = @transform_7, window_bounds = array<i64: 10, 32>}, {pipeline_mode = #tpu.pipeline_mode<synchronous>, transform_indices = @transform_8, window_bounds = array<i64: 16, 32>}, {pipeline_mode = #tpu.pipeline_mode<synchronous>, transform_indices = @transform_9, window_bounds = array<i64: 32, 32>}, {pipeline_mode = #tpu.pipeline_mode<synchronous>, transform_indices = @transform_10, window_bounds = array<i64: 16, 32>}, {pipeline_mode = #tpu.pipeline_mode<synchronous>, transform_indices = @transform_11, window_bounds = array<i64: 2, 32>}, {pipeline_mode = #tpu.pipeline_mode<synchronous>, transform_indices = @transform_12, window_bounds = array<i64: 32, 6>}, {pipeline_mode = #tpu.pipeline_mode<synchronous>, transform_indices = @transform_13, window_bounds = array<i64: 1, 6>}, {transform_indices = @transform_14, window_bounds = array<i64: 1, 1, 32>}, {transform_indices = @transform_15, window_bounds = array<i64: 1, 8, 32>}, {transform_indices = @transform_16, window_bounds = array<i64: 1, 16, 7>}]} {
    %c0 = arith.constant 0 : index
    %c0_0 = arith.constant 0 : index
    %c0_1 = arith.constant 0 : index
    %0 = vector.load %arg1[%c0, %c0_0, %c0_1] : memref<1x2x10xbf16, #tpu.memory_space<vmem>>, vector<1x2x10xbf16>
    %1 = vector.shape_cast %0 : vector<1x2x10xbf16> to vector<2x10xbf16>
    %c0_2 = arith.constant 0 : index
    %c0_3 = arith.constant 0 : index
    %2 = vector.load %arg4[%c0_2, %c0_3] : memref<10x32xbf16, #tpu.memory_space<vmem>>, vector<10x32xbf16>
    %cst = arith.constant dense<0.000000e+00> : vector<2x32xf32>
    %3 = tpu.matmul %1, %2, %cst {dimension_numbers = #tpu.dot_dimension_numbers<[1], [0], [0], [1], [0, 0, 1, 1], [], []>} : vector<2x10xbf16>, vector<10x32xbf16>, vector<2x32xf32> -> vector<2x32xf32>
    %4 = math.tanh %3 : vector<2x32xf32>
    %5 = vector.extract_strided_slice %4 {offsets = [0, 0], sizes = [1, 32], strides = [1, 1]} : vector<2x32xf32> to vector<1x32xf32>
    %6 = arith.truncf %5 : vector<1x32xf32> to vector<1x32xbf16>
    %7 = vector.extract_strided_slice %4 {offsets = [1, 0], sizes = [1, 32], strides = [1, 1]} : vector<2x32xf32> to vector<1x32xf32>
    %8 = arith.truncf %7 : vector<1x32xf32> to vector<1x32xbf16>
    %c0_4 = arith.constant 0 : index
    %c0_5 = arith.constant 0 : index
    %9 = vector.load %arg5[%c0_4, %c0_5] : memref<32x32xbf16, #tpu.memory_space<vmem>>, vector<32x32xbf16>
    %cst_6 = arith.constant dense<0.000000e+00> : vector<1x32xf32>
    %10 = tpu.matmul %6, %9, %cst_6 {dimension_numbers = #tpu.dot_dimension_numbers<[1], [0], [0], [1], [0, 0, 1, 1], [], []>} : vector<1x32xbf16>, vector<32x32xbf16>, vector<1x32xf32> -> vector<1x32xf32>
    %c0_7 = arith.constant 0 : index
    %c0_8 = arith.constant 0 : index
    %11 = vector.load %arg6[%c0_7, %c0_8] : memref<32x32xbf16, #tpu.memory_space<vmem>>, vector<32x32xbf16>
    %cst_9 = arith.constant dense<0.000000e+00> : vector<1x32xf32>
    %12 = tpu.matmul %8, %11, %cst_9 {dimension_numbers = #tpu.dot_dimension_numbers<[1], [0], [0], [1], [0, 0, 1, 1], [], []>} : vector<1x32xbf16>, vector<32x32xbf16>, vector<1x32xf32> -> vector<1x32xf32>
    %13 = arith.addf %10, %12 : vector<1x32xf32>
    %c0_10 = arith.constant 0 : index
    %c0_11 = arith.constant 0 : index
    %14 = vector.load %arg7[%c0_10, %c0_11] : memref<1x32xf32, #tpu.memory_space<vmem>>, vector<1x32xf32>
    %15 = arith.addf %13, %14 : vector<1x32xf32>
    %16 = vector.extract_strided_slice %15 {offsets = [0, 0], sizes = [1, 16], strides = [1, 1]} : vector<1x32xf32> to vector<1x16xf32>
    %c0_12 = arith.constant 0 : index
    %c0_13 = arith.constant 0 : index
    %c0_14 = arith.constant 0 : index
    %17 = vector.load %arg15[%c0_12, %c0_13, %c0_14] : memref<1x1x32xf32, #tpu.memory_space<vmem>>, vector<1x1x16xf32>
    %18 = vector.shape_cast %17 : vector<1x1x16xf32> to vector<1x16xf32>
    %19 = vector.shape_cast %16 : vector<1x16xf32> to vector<1x1x16xf32>
    tpu.vector_store %arg15[%c0_12, %c0_13, %c0_14], %19 {strides = array<i32>} : memref<1x1x32xf32, #tpu.memory_space<vmem>>, vector<1x1x16xf32>,
    %20 = vector.extract_strided_slice %15 {offsets = [0, 16], sizes = [1, 16], strides = [1, 1]} : vector<1x32xf32> to vector<1x16xf32>
    %cst_15 = arith.constant 0.000000e+00 : f32
    %21 = vector.broadcast %cst_15 : f32 to vector<1x16xf32>
    %22 = arith.maximumf %20, %21 : vector<1x16xf32>
    %23 = vector.broadcast %cst_15 : f32 to vector<1x16xf32>
    %24 = arith.subf %20, %23 : vector<1x16xf32>
    %25 = arith.cmpf one, %24, %24 : vector<1x16xf32>
    %26 = vector.broadcast %cst_15 : f32 to vector<1x16xf32>
    %27 = arith.addf %20, %26 : vector<1x16xf32>
    %28 = math.absf %24 : vector<1x16xf32>
    %cst_16 = arith.constant 0.000000e+00 : f32
    %29 = vector.broadcast %cst_16 : f32 to vector<1x16xf32>
    %30 = arith.subf %29, %28 : vector<1x16xf32>
    %31 = math.exp %30 : vector<1x16xf32>
    %32 = math.log1p %31 : vector<1x16xf32>
    %33 = arith.addf %22, %32 : vector<1x16xf32>
    %34 = arith.select %25, %27, %33 : vector<1x16xi1>, vector<1x16xf32>
    %c0_17 = arith.constant 0 : index
    %c0_18 = arith.constant 0 : index
    %c16 = arith.constant 16 : index
    %35 = vector.load %arg15[%c0_17, %c0_18, %c16] : memref<1x1x32xf32, #tpu.memory_space<vmem>>, vector<1x1x16xf32>
    %36 = vector.shape_cast %35 : vector<1x1x16xf32> to vector<1x16xf32>
    %37 = vector.shape_cast %34 : vector<1x16xf32> to vector<1x1x16xf32>
    tpu.vector_store %arg15[%c0_17, %c0_18, %c16], %37 {strides = array<i32>} : memref<1x1x32xf32, #tpu.memory_space<vmem>>, vector<1x1x16xf32>,
    %38 = arith.truncf %16 : vector<1x16xf32> to vector<1x16xbf16>
    %c0_19 = arith.constant 0 : index
    %c0_20 = arith.constant 0 : index
    %39 = vector.load %arg9[%c0_19, %c0_20] : memref<16x32xbf16, #tpu.memory_space<vmem>>, vector<16x32xbf16>
    %cst_21 = arith.constant dense<0.000000e+00> : vector<1x32xf32>
    %40 = tpu.matmul %38, %39, %cst_21 {dimension_numbers = #tpu.dot_dimension_numbers<[1], [0], [0], [1], [0, 0, 1, 1], [], []>} : vector<1x16xbf16>, vector<16x32xbf16>, vector<1x32xf32> -> vector<1x32xf32>
    %c0_22 = arith.constant 0 : index
    %c0_23 = arith.constant 0 : index
    %c0_24 = arith.constant 0 : index
    %41 = vector.load %arg2[%c0_22, %c0_23, %c0_24] : memref<1x8x10xbf16, #tpu.memory_space<vmem>>, vector<1x8x10xbf16>
    %42 = vector.shape_cast %41 : vector<1x8x10xbf16> to vector<8x10xbf16>
    %c0_25 = arith.constant 0 : index
    %c0_26 = arith.constant 0 : index
    %43 = vector.load %arg8[%c0_25, %c0_26] : memref<10x32xbf16, #tpu.memory_space<vmem>>, vector<10x32xbf16>
    %cst_27 = arith.constant dense<0.000000e+00> : vector<8x32xf32>
    %44 = tpu.matmul %42, %43, %cst_27 {dimension_numbers = #tpu.dot_dimension_numbers<[1], [0], [0], [1], [0, 0, 1, 1], [], []>} : vector<8x10xbf16>, vector<10x32xbf16>, vector<8x32xf32> -> vector<8x32xf32>
    %45 = vector.broadcast %40 : vector<1x32xf32> to vector<8x32xf32>
    %46 = arith.addf %44, %45 : vector<8x32xf32>
    %47 = math.tanh %46 : vector<8x32xf32>
    %c0_28 = arith.constant 0 : index
    %c0_29 = arith.constant 0 : index
    %c0_30 = arith.constant 0 : index
    %48 = vector.load %arg16[%c0_28, %c0_29, %c0_30] : memref<1x8x32xf32, #tpu.memory_space<vmem>>, vector<1x8x32xf32>
    %49 = vector.shape_cast %48 : vector<1x8x32xf32> to vector<8x32xf32>
    %50 = vector.shape_cast %47 : vector<8x32xf32> to vector<1x8x32xf32>
    tpu.vector_store %arg16[%c0_28, %c0_29, %c0_30], %50 {strides = array<i32>} : memref<1x8x32xf32, #tpu.memory_space<vmem>>, vector<1x8x32xf32>,
    %c0_31 = arith.constant 0 : index
    %c0_32 = arith.constant 0 : index
    %51 = vector.load %arg11[%c0_31, %c0_32] : memref<16x32xbf16, #tpu.memory_space<vmem>>, vector<16x32xbf16>
    %cst_33 = arith.constant dense<0.000000e+00> : vector<1x32xf32>
    %52 = tpu.matmul %38, %51, %cst_33 {dimension_numbers = #tpu.dot_dimension_numbers<[1], [0], [0], [1], [0, 0, 1, 1], [], []>} : vector<1x16xbf16>, vector<16x32xbf16>, vector<1x32xf32> -> vector<1x32xf32>
    %53 = arith.truncf %47 : vector<8x32xf32> to vector<8x32xbf16>
    %c0_34 = arith.constant 0 : index
    %c0_35 = arith.constant 0 : index
    %54 = vector.load %arg10[%c0_34, %c0_35] : memref<32x32xbf16, #tpu.memory_space<vmem>>, vector<32x32xbf16>
    %cst_36 = arith.constant dense<0.000000e+00> : vector<8x32xf32>
    %55 = tpu.matmul %53, %54, %cst_36 {dimension_numbers = #tpu.dot_dimension_numbers<[1], [0], [0], [1], [0, 0, 1, 1], [], []>} : vector<8x32xbf16>, vector<32x32xbf16>, vector<8x32xf32> -> vector<8x32xf32>
    %56 = vector.broadcast %52 : vector<1x32xf32> to vector<8x32xf32>
    %57 = arith.addf %55, %56 : vector<8x32xf32>
    %c0_37 = arith.constant 0 : index
    %c0_38 = arith.constant 0 : index
    %58 = vector.load %arg12[%c0_37, %c0_38] : memref<2x32xf32, #tpu.memory_space<vmem>>, vector<1x32xf32>
    %59 = vector.broadcast %58 : vector<1x32xf32> to vector<8x32xf32>
    %60 = arith.addf %57, %59 : vector<8x32xf32>
    %61 = math.tanh %60 : vector<8x32xf32>
    %c0_39 = arith.constant 0 : index
    %c0_40 = arith.constant 0 : index
    %c0_41 = arith.constant 0 : index
    %62 = vector.load %arg3[%c0_39, %c0_40, %c0_41] : memref<1x8x1xf32, #tpu.memory_space<vmem>>, vector<1x8x1xf32>
    %63 = vector.shape_cast %62 : vector<1x8x1xf32> to vector<8x1xf32>
    %c1 = arith.constant 1 : index
    %c0_42 = arith.constant 0 : index
    %64 = vector.load %arg12[%c1, %c0_42] : memref<2x32xf32, #tpu.memory_space<vmem>>, vector<1x32xf32>
    %65 = vector.broadcast %63 : vector<8x1xf32> to vector<8x32xf32>
    %66 = vector.broadcast %64 : vector<1x32xf32> to vector<8x32xf32>
    %67 = arith.mulf %65, %66 : vector<8x32xf32>
    %68 = arith.addf %60, %67 : vector<8x32xf32>
    %69 = math.tanh %68 : vector<8x32xf32>
    %70 = tpu.concatenate %61, %69 in 0 : vector<8x32xf32>, vector<8x32xf32> -> vector<16x32xf32>
    %71 = arith.truncf %70 : vector<16x32xf32> to vector<16x32xbf16>
    %c0_43 = arith.constant 0 : index
    %c0_44 = arith.constant 0 : index
    %72 = vector.load %arg13[%c0_43, %c0_44] : memref<32x6xbf16, #tpu.memory_space<vmem>>, vector<32x6xbf16>
    %cst_45 = arith.constant dense<0.000000e+00> : vector<16x6xf32>
    %73 = tpu.matmul %71, %72, %cst_45 {dimension_numbers = #tpu.dot_dimension_numbers<[1], [0], [0], [1], [0, 0, 1, 1], [], []>} : vector<16x32xbf16>, vector<32x6xbf16>, vector<16x6xf32> -> vector<16x6xf32>
    %c0_46 = arith.constant 0 : index
    %c0_47 = arith.constant 0 : index
    %74 = vector.load %arg14[%c0_46, %c0_47] : memref<1x6xf32, #tpu.memory_space<vmem>>, vector<1x6xf32>
    %75 = vector.broadcast %74 : vector<1x6xf32> to vector<16x6xf32>
    %76 = arith.addf %73, %75 : vector<16x6xf32>
    %cst_48 = arith.constant 0.000000e+00 : f32
    %77 = vector.broadcast %cst_48 : f32 to vector<16x6xf32>
    %78 = arith.maximumf %76, %77 : vector<16x6xf32>
    %79 = vector.broadcast %cst_48 : f32 to vector<16x6xf32>
    %80 = arith.subf %76, %79 : vector<16x6xf32>
    %81 = arith.cmpf one, %80, %80 : vector<16x6xf32>
    %82 = vector.broadcast %cst_48 : f32 to vector<16x6xf32>
    %83 = arith.addf %76, %82 : vector<16x6xf32>
    %84 = math.absf %80 : vector<16x6xf32>
    %cst_49 = arith.constant 0.000000e+00 : f32
    %85 = vector.broadcast %cst_49 : f32 to vector<16x6xf32>
    %86 = arith.subf %85, %84 : vector<16x6xf32>
    %87 = math.exp %86 : vector<16x6xf32>
    %88 = math.log1p %87 : vector<16x6xf32>
    %89 = arith.addf %78, %88 : vector<16x6xf32>
    %90 = arith.select %81, %83, %89 : vector<16x6xi1>, vector<16x6xf32>
    %cst_50 = arith.constant -2.000000e+01 : f32
    %91 = vector.broadcast %cst_50 : f32 to vector<16x6xf32>
    %92 = arith.cmpf olt, %76, %91 : vector<16x6xf32>
    %cst_51 = arith.constant 1.000000e-30 : f32
    %93 = vector.broadcast %cst_51 : f32 to vector<16x6xf32>
    %94 = arith.maximumf %90, %93 : vector<16x6xf32>
    %95 = math.log %94 : vector<16x6xf32>
    %96 = arith.select %92, %76, %95 : vector<16x6xi1>, vector<16x6xf32>
    %c0_52 = arith.constant 0 : index
    %c0_53 = arith.constant 0 : index
    %c0_54 = arith.constant 0 : index
    %97 = vector.load %arg17[%c0_52, %c0_53, %c0_54] : memref<1x16x7xf32, #tpu.memory_space<vmem>>, vector<1x16x6xf32>
    %98 = vector.shape_cast %97 : vector<1x16x6xf32> to vector<16x6xf32>
    %99 = vector.shape_cast %96 : vector<16x6xf32> to vector<1x16x6xf32>
    tpu.vector_store %arg17[%c0_52, %c0_53, %c0_54], %99 {strides = array<i32>} : memref<1x16x7xf32, #tpu.memory_space<vmem>>, vector<1x16x6xf32>,
    %cst_55 = arith.constant dense<0.000000e+00> : vector<16xf32>
    %100 = vector.multi_reduction <add>, %90, %cst_55 [1] : vector<16x6xf32> to vector<16xf32>
    %101 = vector.shape_cast %100 : vector<16xf32> to vector<16x1xf32>
    %c0_56 = arith.constant 0 : index
    %c0_57 = arith.constant 0 : index
    %c6 = arith.constant 6 : index
    %102 = vector.load %arg17[%c0_56, %c0_57, %c6] : memref<1x16x7xf32, #tpu.memory_space<vmem>>, vector<1x16x1xf32>
    %103 = vector.shape_cast %102 : vector<1x16x1xf32> to vector<16x1xf32>
    %104 = vector.shape_cast %101 : vector<16x1xf32> to vector<1x16x1xf32>
    tpu.vector_store %arg17[%c0_56, %c0_57, %c6], %104 {strides = array<i32>} : memref<1x16x7xf32, #tpu.memory_space<vmem>>, vector<1x16x1xf32>,
    return
  }
  func.func @transform_0(%arg0: i32) -> (i32, i32, i32) {
    %c0_i32 = arith.constant 0 : i32
    %c0_i32_0 = arith.constant 0 : i32
    %c0_i32_1 = arith.constant 0 : i32
    return %arg0, %c0_i32, %c0_i32_0 : i32, i32, i32
  }
  func.func @transform_1(%arg0: i32) -> (i32, i32, i32) {
    %c0_i32 = arith.constant 0 : i32
    %c0_i32_0 = arith.constant 0 : i32
    %c0_i32_1 = arith.constant 0 : i32
    return %arg0, %c0_i32, %c0_i32_0 : i32, i32, i32
  }
  func.func @transform_2(%arg0: i32) -> (i32, i32, i32) {
    %c0_i32 = arith.constant 0 : i32
    %c0_i32_0 = arith.constant 0 : i32
    %c0_i32_1 = arith.constant 0 : i32
    return %arg0, %c0_i32, %c0_i32_0 : i32, i32, i32
  }
  func.func @transform_3(%arg0: i32) -> (i32, i32) {
    %c0_i32 = arith.constant 0 : i32
    %c0_i32_0 = arith.constant 0 : i32
    %c0_i32_1 = arith.constant 0 : i32
    return %c0_i32, %c0_i32_0 : i32, i32
  }
  func.func @transform_4(%arg0: i32) -> (i32, i32) {
    %c0_i32 = arith.constant 0 : i32
    %c0_i32_0 = arith.constant 0 : i32
    %c0_i32_1 = arith.constant 0 : i32
    return %c0_i32, %c0_i32_0 : i32, i32
  }
  func.func @transform_5(%arg0: i32) -> (i32, i32) {
    %c0_i32 = arith.constant 0 : i32
    %c0_i32_0 = arith.constant 0 : i32
    %c0_i32_1 = arith.constant 0 : i32
    return %c0_i32, %c0_i32_0 : i32, i32
  }
  func.func @transform_6(%arg0: i32) -> (i32, i32) {
    %c0_i32 = arith.constant 0 : i32
    %c0_i32_0 = arith.constant 0 : i32
    %c0_i32_1 = arith.constant 0 : i32
    return %c0_i32, %c0_i32_0 : i32, i32
  }
  func.func @transform_7(%arg0: i32) -> (i32, i32) {
    %c0_i32 = arith.constant 0 : i32
    %c0_i32_0 = arith.constant 0 : i32
    %c0_i32_1 = arith.constant 0 : i32
    return %c0_i32, %c0_i32_0 : i32, i32
  }
  func.func @transform_8(%arg0: i32) -> (i32, i32) {
    %c0_i32 = arith.constant 0 : i32
    %c0_i32_0 = arith.constant 0 : i32
    %c0_i32_1 = arith.constant 0 : i32
    return %c0_i32, %c0_i32_0 : i32, i32
  }
  func.func @transform_9(%arg0: i32) -> (i32, i32) {
    %c0_i32 = arith.constant 0 : i32
    %c0_i32_0 = arith.constant 0 : i32
    %c0_i32_1 = arith.constant 0 : i32
    return %c0_i32, %c0_i32_0 : i32, i32
  }
  func.func @transform_10(%arg0: i32) -> (i32, i32) {
    %c0_i32 = arith.constant 0 : i32
    %c0_i32_0 = arith.constant 0 : i32
    %c0_i32_1 = arith.constant 0 : i32
    return %c0_i32, %c0_i32_0 : i32, i32
  }
  func.func @transform_11(%arg0: i32) -> (i32, i32) {
    %c0_i32 = arith.constant 0 : i32
    %c0_i32_0 = arith.constant 0 : i32
    %c0_i32_1 = arith.constant 0 : i32
    return %c0_i32, %c0_i32_0 : i32, i32
  }
  func.func @transform_12(%arg0: i32) -> (i32, i32) {
    %c0_i32 = arith.constant 0 : i32
    %c0_i32_0 = arith.constant 0 : i32
    %c0_i32_1 = arith.constant 0 : i32
    return %c0_i32, %c0_i32_0 : i32, i32
  }
  func.func @transform_13(%arg0: i32) -> (i32, i32) {
    %c0_i32 = arith.constant 0 : i32
    %c0_i32_0 = arith.constant 0 : i32
    %c0_i32_1 = arith.constant 0 : i32
    return %c0_i32, %c0_i32_0 : i32, i32
  }
  func.func @transform_14(%arg0: i32) -> (i32, i32, i32) {
    %c0_i32 = arith.constant 0 : i32
    %c0_i32_0 = arith.constant 0 : i32
    %c0_i32_1 = arith.constant 0 : i32
    return %arg0, %c0_i32, %c0_i32_0 : i32, i32, i32
  }
  func.func @transform_15(%arg0: i32) -> (i32, i32, i32) {
    %c0_i32 = arith.constant 0 : i32
    %c0_i32_0 = arith.constant 0 : i32
    %c0_i32_1 = arith.constant 0 : i32
    return %arg0, %c0_i32, %c0_i32_0 : i32, i32, i32
  }
  func.func @transform_16(%arg0: i32) -> (i32, i32, i32) {
    %c0_i32 = arith.constant 0 : i32
    %c0_i32_0 = arith.constant 0 : i32
    %c0_i32_1 = arith.constant 0 : i32
    return %arg0, %c0_i32, %c0_i32_0 : i32, i32, i32
  }
}

</mosaic_0001>

<llo_original>
// kernel: pp_model_forward.1
$region0: #{pp_model_forward.1}
  #allocation0 [shape = 'u32[]', space=smem, size = 0x4, offset = 0x4, fixed_abs, tag = 'smem constant byte address 0x4 - core index']
  #allocation1 [shape = 'u32[144,128]{1,0:T(1,128)}', space=vmem, size = 0x12000, scoped, tag = 'internal scratch']
  %s0 = inlined_call_operand.vmem [shape: bf16[2,2,10], index: 0, kind: input, shape index: {}]
  %s1 = inlined_call_operand.vmem [shape: bf16[2,8,10], index: 1, kind: input, shape index: {}]
  %s2 = inlined_call_operand.vmem [shape: f32[2,8,1], index: 2, kind: input, shape index: {}]
  %s3 = inlined_call_operand.vmem [shape: bf16[10,32], index: 3, kind: input, shape index: {}]
  %s4 = inlined_call_operand.vmem [shape: bf16[32,32], index: 4, kind: input, shape index: {}]
  %s5 = inlined_call_operand.vmem [shape: bf16[32,32], index: 5, kind: input, shape index: {}]
  %s6 = inlined_call_operand.vmem [shape: f32[1,32], index: 6, kind: input, shape index: {}]
  %s7 = inlined_call_operand.vmem [shape: bf16[10,32], index: 7, kind: input, shape index: {}]
  %s8 = inlined_call_operand.vmem [shape: bf16[16,32], index: 8, kind: input, shape index: {}]
  %s9 = inlined_call_operand.vmem [shape: bf16[32,32], index: 9, kind: input, shape index: {}]
  %s10 = inlined_call_operand.vmem [shape: bf16[16,32], index: 10, kind: input, shape index: {}]
  %s11 = inlined_call_operand.vmem [shape: f32[2,32], index: 11, kind: input, shape index: {}]
  %s12 = inlined_call_operand.vmem [shape: bf16[32,6], index: 12, kind: input, shape index: {}]
  %s13 = inlined_call_operand.vmem [shape: f32[1,6], index: 13, kind: input, shape index: {}]
  %s14 = inlined_call_operand.vmem [shape: f32[2,1,32], index: 14, kind: output, shape index: {0}]
  %s15 = inlined_call_operand.hbm [shape: f32[2,8,32], index: 15, kind: output, shape index: {1}]
  %s16 = inlined_call_operand.vmem [shape: f32[2,16,7], index: 16, kind: output, shape index: {2}]
  %17 = xla_tuple %s14, %s15, %s16
  %s18 = sld [smem:[#allocation0]]
  $region105: #{pp_model_forward.1} parent=0
    _
  %s20 = ssub.s32 1, %s18
  %s21 = scalar_select 0, %s20, %s18
  $region1: #{pp_model_forward.1} parent=0
    #allocation2 [shape = 'u8[8192]{0}', space=vmem, size = 0x2000, scoped, tag = 'output window, operand 1']
    #allocation3 [shape = 's32[2]{0}', space=sflag, size = 0x8, scoped, tag = 'scoped memory for pp_model_forward.1']
    %22 = vsyncpa [#allocation3], 0
    %s23 = scalar_lea.sflag [#allocation3], 1
    %24 = vsyncpa %s23, 0
    loop: start=0, step=1, limit=4
    $region2: #{pp_model_forward.1} parent=1 // loop_pre_header
      _
    $region3: #{pp_model_forward.1} parent=1 // loop_header
      %s26 = sphi 0, %s30
      %p27 = scmp.ge.s32.totalorder %s26, 4
      %s36 = sphi 0, %s38
      %s39 = sphi 0, %s36
      %s40 = sphi 0, %s39
      %s56 = sphi 0, %s40
      %s62 = sphi 0, %s64
      %s65 = sphi 0, %s62
      %s66 = sphi 0, %s65
      %s82 = sphi 0, %s66
      %s88 = sphi 0, %s90
      %s91 = sphi 0, %s88
      %s92 = sphi 0, %s91
      %s108 = sphi 0, %s92
      %s112 = sphi 0, %s112
      %s114 = sphi 0, %s112
      %s115 = sphi 0, %s114
      %s129 = sphi 0, %s115
      %s133 = sphi 0, %s133
      %s135 = sphi 0, %s133
      %s136 = sphi 0, %s135
      %s150 = sphi 0, %s136
      %s154 = sphi 0, %s154
      %s156 = sphi 0, %s154
      %s157 = sphi 0, %s156
      %s171 = sphi 0, %s157
      %s175 = sphi 0, %s175
      %s177 = sphi 0, %s175
      %s178 = sphi 0, %s177
      %s192 = sphi 0, %s178
      %s196 = sphi 0, %s196
      %s198 = sphi 0, %s196
      %s199 = sphi 0, %s198
      %s213 = sphi 0, %s199
      %s217 = sphi 0, %s217
      %s219 = sphi 0, %s217
      %s220 = sphi 0, %s219
      %s234 = sphi 0, %s220
      %s238 = sphi 0, %s238
      %s240 = sphi 0, %s238
      %s241 = sphi 0, %s240
      %s255 = sphi 0, %s241
      %s259 = sphi 0, %s259
      %s261 = sphi 0, %s259
      %s262 = sphi 0, %s261
      %s276 = sphi 0, %s262
      %s280 = sphi 0, %s280
      %s282 = sphi 0, %s280
      %s283 = sphi 0, %s282
      %s297 = sphi 0, %s283
      %s301 = sphi 0, %s301
      %s303 = sphi 0, %s301
      %s304 = sphi 0, %s303
      %s318 = sphi 0, %s304
      %s322 = sphi 0, %s322
      %s324 = sphi 0, %s322
      %s325 = sphi 0, %s324
      %s339 = sphi 0, %s325
      %s345 = sphi 0, %s347
      %s348 = sphi 0, %s345
      %s349 = sphi 0, %s348
      %s365 = sphi 0, %s349
      %s371 = sphi 0, %s373
      %s374 = sphi 0, %s371
      %s375 = sphi 0, %s374
      %s391 = sphi 0, %s375
      %s397 = sphi 0, %s399
      %s400 = sphi 0, %s397
      %s401 = sphi 0, %s400
      %s417 = sphi 0, %s401
    $region4: #{pp_model_forward.1} parent=1 // loop_header_branch
      %29 = sbr.rel (%p27) target = $region8
    $region5: #{pp_model_forward.1} parent=1 // loop_body
      %s31 = ssub.s32 %s26, 1
      %s32 = ssub.s32 %s26, 2
      %s33 = sadd.s32 %s26, 1
      %s34 = ssub.s32 %s26, %s33
      %p35 = scmp.eq.s32.totalorder %s34, 0
      %s37 = sadd.s32 %s36, 1
      %s38 = scalar_select %p35, %s36, %s37
      %p41 = pneg %p35
      %p42 = scmp.eq.s32.totalorder %s26, 1
      %p43 = por %p41, %p42
      %p44 = scmp.ne.s32.totalorder %s36, %s39
      %p45 = scmp.eq.s32.totalorder %s26, 0
      %p46 = por %p44, %p45
      %p47 = scmp.ne.s32.totalorder %s36, %s39
      %p48 = scmp.eq.s32.totalorder %s31, 1
      %p49 = por %p47, %p48
      %p50 = scmp.ne.s32.totalorder %s39, %s40
      %p51 = scmp.eq.s32.totalorder %s31, 0
      %p52 = por %p50, %p51
      %p53 = scmp.ne.s32.totalorder %s39, %s40
      %p54 = scmp.eq.s32.totalorder %s32, 1
      %p55 = por %p53, %p54
      %p57 = scmp.ne.s32.totalorder %s40, %s56
      %p58 = scmp.eq.s32.totalorder %s32, 0
      %p59 = por %p57, %p58
      %s60 = ssub.s32 %s26, %s33
      %p61 = scmp.eq.s32.totalorder %s60, 0
      %s63 = sadd.s32 %s62, 1
      %s64 = scalar_select %p61, %s62, %s63
      %p67 = pneg %p61
      %p68 = scmp.eq.s32.totalorder %s26, 1
      %p69 = por %p67, %p68
      %p70 = scmp.ne.s32.totalorder %s62, %s65
      %p71 = scmp.eq.s32.totalorder %s26, 0
      %p72 = por %p70, %p71
      %p73 = scmp.ne.s32.totalorder %s62, %s65
      %p74 = scmp.eq.s32.totalorder %s31, 1
      %p75 = por %p73, %p74
      %p76 = scmp.ne.s32.totalorder %s65, %s66
      %p77 = scmp.eq.s32.totalorder %s31, 0
      %p78 = por %p76, %p77
      %p79 = scmp.ne.s32.totalorder %s65, %s66
      %p80 = scmp.eq.s32.totalorder %s32, 1
      %p81 = por %p79, %p80
      %p83 = scmp.ne.s32.totalorder %s66, %s82
      %p84 = scmp.eq.s32.totalorder %s32, 0
      %p85 = por %p83, %p84
      %s86 = ssub.s32 %s26, %s33
      %p87 = scmp.eq.s32.totalorder %s86, 0
      %s89 = sadd.s32 %s88, 1
      %s90 = scalar_select %p87, %s88, %s89
      %p93 = pneg %p87
      %p94 = scmp.eq.s32.totalorder %s26, 1
      %p95 = por %p93, %p94
      %p96 = scmp.ne.s32.totalorder %s88, %s91
      %p97 = scmp.eq.s32.totalorder %s26, 0
      %p98 = por %p96, %p97
      %p99 = scmp.ne.s32.totalorder %s88, %s91
      %p100 = scmp.eq.s32.totalorder %s31, 1
      %p101 = por %p99, %p100
      %p102 = scmp.ne.s32.totalorder %s91, %s92
      %p103 = scmp.eq.s32.totalorder %s31, 0
      %p104 = por %p102, %p103
      %p105 = scmp.ne.s32.totalorder %s91, %s92
      %p106 = scmp.eq.s32.totalorder %s32, 1
      %p107 = por %p105, %p106
      %p109 = scmp.ne.s32.totalorder %s92, %s108
      %p110 = scmp.eq.s32.totalorder %s32, 0
      %p111 = por %p109, %p110
      %s113 = sadd.s32 %s112, 1
      %p116 = scmp.eq.s32.totalorder %s26, 1
      %p117 = scmp.ne.s32.totalorder %s112, %s114
      %p118 = scmp.eq.s32.totalorder %s26, 0
      %p119 = por %p117, %p118
      %p120 = scmp.ne.s32.totalorder %s112, %s114
      %p121 = scmp.eq.s32.totalorder %s31, 1
      %p122 = por %p120, %p121
      %p123 = scmp.ne.s32.totalorder %s114, %s115
      %p124 = scmp.eq.s32.totalorder %s31, 0
      %p125 = por %p123, %p124
      %p126 = scmp.ne.s32.totalorder %s114, %s115
      %p127 = scmp.eq.s32.totalorder %s32, 1
      %p128 = por %p126, %p127
      %p130 = scmp.ne.s32.totalorder %s115, %s129
      %p131 = scmp.eq.s32.totalorder %s32, 0
      %p132 = por %p130, %p131
      %s134 = sadd.s32 %s133, 1
      %p137 = scmp.eq.s32.totalorder %s26, 1
      %p138 = scmp.ne.s32.totalorder %s133, %s135
      %p139 = scmp.eq.s32.totalorder %s26, 0
      %p140 = por %p138, %p139
      %p141 = scmp.ne.s32.totalorder %s133, %s135
      %p142 = scmp.eq.s32.totalorder %s31, 1
      %p143 = por %p141, %p142
      %p144 = scmp.ne.s32.totalorder %s135, %s136
      %p145 = scmp.eq.s32.totalorder %s31, 0
      %p146 = por %p144, %p145
      %p147 = scmp.ne.s32.totalorder %s135, %s136
      %p148 = scmp.eq.s32.totalorder %s32, 1
      %p149 = por %p147, %p148
      %p151 = scmp.ne.s32.totalorder %s136, %s150
      %p152 = scmp.eq.s32.totalorder %s32, 0
      %p153 = por %p151, %p152
      %s155 = sadd.s32 %s154, 1
      %p158 = scmp.eq.s32.totalorder %s26, 1
      %p159 = scmp.ne.s32.totalorder %s154, %s156
      %p160 = scmp.eq.s32.totalorder %s26, 0
      %p161 = por %p159, %p160
      %p162 = scmp.ne.s32.totalorder %s154, %s156
      %p163 = scmp.eq.s32.totalorder %s31, 1
      %p164 = por %p162, %p163
      %p165 = scmp.ne.s32.totalorder %s156, %s157
      %p166 = scmp.eq.s32.totalorder %s31, 0
      %p167 = por %p165, %p166
      %p168 = scmp.ne.s32.totalorder %s156, %s157
      %p169 = scmp.eq.s32.totalorder %s32, 1
      %p170 = por %p168, %p169
      %p172 = scmp.ne.s32.totalorder %s157, %s171
      %p173 = scmp.eq.s32.totalorder %s32, 0
      %p174 = por %p172, %p173
      %s176 = sadd.s32 %s175, 1
      %p179 = scmp.eq.s32.totalorder %s26, 1
      %p180 = scmp.ne.s32.totalorder %s175, %s177
      %p181 = scmp.eq.s32.totalorder %s26, 0
      %p182 = por %p180, %p181
      %p183 = scmp.ne.s32.totalorder %s175, %s177
      %p184 = scmp.eq.s32.totalorder %s31, 1
      %p185 = por %p183, %p184
      %p186 = scmp.ne.s32.totalorder %s177, %s178
      %p187 = scmp.eq.s32.totalorder %s31, 0
      %p188 = por %p186, %p187
      %p189 = scmp.ne.s32.totalorder %s177, %s178
      %p190 = scmp.eq.s32.totalorder %s32, 1
      %p191 = por %p189, %p190
      %p193 = scmp.ne.s32.totalorder %s178, %s192
      %p194 = scmp.eq.s32.totalorder %s32, 0
      %p195 = por %p193, %p194
      %s197 = sadd.s32 %s196, 1
      %p200 = scmp.eq.s32.totalorder %s26, 1
      %p201 = scmp.ne.s32.totalorder %s196, %s198
      %p202 = scmp.eq.s32.totalorder %s26, 0
      %p203 = por %p201, %p202
      %p204 = scmp.ne.s32.totalorder %s196, %s198
      %p205 = scmp.eq.s32.totalorder %s31, 1
      %p206 = por %p204, %p205
      %p207 = scmp.ne.s32.totalorder %s198, %s199
      %p208 = scmp.eq.s32.totalorder %s31, 0
      %p209 = por %p207, %p208
      %p210 = scmp.ne.s32.totalorder %s198, %s199
      %p211 = scmp.eq.s32.totalorder %s32, 1
      %p212 = por %p210, %p211
      %p214 = scmp.ne.s32.totalorder %s199, %s213
      %p215 = scmp.eq.s32.totalorder %s32, 0
      %p216 = por %p214, %p215
      %s218 = sadd.s32 %s217, 1
      %p221 = scmp.eq.s32.totalorder %s26, 1
      %p222 = scmp.ne.s32.totalorder %s217, %s219
      %p223 = scmp.eq.s32.totalorder %s26, 0
      %p224 = por %p222, %p223
      %p225 = scmp.ne.s32.totalorder %s217, %s219
      %p226 = scmp.eq.s32.totalorder %s31, 1
      %p227 = por %p225, %p226
      %p228 = scmp.ne.s32.totalorder %s219, %s220
      %p229 = scmp.eq.s32.totalorder %s31, 0
      %p230 = por %p228, %p229
      %p231 = scmp.ne.s32.totalorder %s219, %s220
      %p232 = scmp.eq.s32.totalorder %s32, 1
      %p233 = por %p231, %p232
      %p235 = scmp.ne.s32.totalorder %s220, %s234
      %p236 = scmp.eq.s32.totalorder %s32, 0
      %p237 = por %p235, %p236
      %s239 = sadd.s32 %s238, 1
      %p242 = scmp.eq.s32.totalorder %s26, 1
      %p243 = scmp.ne.s32.totalorder %s238, %s240
      %p244 = scmp.eq.s32.totalorder %s26, 0
      %p245 = por %p243, %p244
      %p246 = scmp.ne.s32.totalorder %s238, %s240
      %p247 = scmp.eq.s32.totalorder %s31, 1
      %p248 = por %p246, %p247
      %p249 = scmp.ne.s32.totalorder %s240, %s241
      %p250 = scmp.eq.s32.totalorder %s31, 0
      %p251 = por %p249, %p250
      %p252 = scmp.ne.s32.totalorder %s240, %s241
      %p253 = scmp.eq.s32.totalorder %s32, 1
      %p254 = por %p252, %p253
      %p256 = scmp.ne.s32.totalorder %s241, %s255
      %p257 = scmp.eq.s32.totalorder %s32, 0
      %p258 = por %p256, %p257
      %s260 = sadd.s32 %s259, 1
      %p263 = scmp.eq.s32.totalorder %s26, 1
      %p264 = scmp.ne.s32.totalorder %s259, %s261
      %p265 = scmp.eq.s32.totalorder %s26, 0
      %p266 = por %p264, %p265
      %p267 = scmp.ne.s32.totalorder %s259, %s261
      %p268 = scmp.eq.s32.totalorder %s31, 1
      %p269 = por %p267, %p268
      %p270 = scmp.ne.s32.totalorder %s261, %s262
      %p271 = scmp.eq.s32.totalorder %s31, 0
      %p272 = por %p270, %p271
      %p273 = scmp.ne.s32.totalorder %s261, %s262
      %p274 = scmp.eq.s32.totalorder %s32, 1
      %p275 = por %p273, %p274
      %p277 = scmp.ne.s32.totalorder %s262, %s276
      %p278 = scmp.eq.s32.totalorder %s32, 0
      %p279 = por %p277, %p278
      %s281 = sadd.s32 %s280, 1
      %p284 = scmp.eq.s32.totalorder %s26, 1
      %p285 = scmp.ne.s32.totalorder %s280, %s282
      %p286 = scmp.eq.s32.totalorder %s26, 0
      %p287 = por %p285, %p286
      %p288 = scmp.ne.s32.totalorder %s280, %s282
      %p289 = scmp.eq.s32.totalorder %s31, 1
      %p290 = por %p288, %p289
      %p291 = scmp.ne.s32.totalorder %s282, %s283
      %p292 = scmp.eq.s32.totalorder %s31, 0
      %p293 = por %p291, %p292
      %p294 = scmp.ne.s32.totalorder %s282, %s283
      %p295 = scmp.eq.s32.totalorder %s32, 1
      %p296 = por %p294, %p295
      %p298 = scmp.ne.s32.totalorder %s283, %s297
      %p299 = scmp.eq.s32.totalorder %s32, 0
      %p300 = por %p298, %p299
      %s302 = sadd.s32 %s301, 1
      %p305 = scmp.eq.s32.totalorder %s26, 1
      %p306 = scmp.ne.s32.totalorder %s301, %s303
      %p307 = scmp.eq.s32.totalorder %s26, 0
      %p308 = por %p306, %p307
      %p309 = scmp.ne.s32.totalorder %s301, %s303
      %p310 = scmp.eq.s32.totalorder %s31, 1
      %p311 = por %p309, %p310
      %p312 = scmp.ne.s32.totalorder %s303, %s304
      %p313 = scmp.eq.s32.totalorder %s31, 0
      %p314 = por %p312, %p313
      %p315 = scmp.ne.s32.totalorder %s303, %s304
      %p316 = scmp.eq.s32.totalorder %s32, 1
      %p317 = por %p315, %p316
      %p319 = scmp.ne.s32.totalorder %s304, %s318
      %p320 = scmp.eq.s32.totalorder %s32, 0
      %p321 = por %p319, %p320
      %s323 = sadd.s32 %s322, 1
      %p326 = scmp.eq.s32.totalorder %s26, 1
      %p327 = scmp.ne.s32.totalorder %s322, %s324
      %p328 = scmp.eq.s32.totalorder %s26, 0
      %p329 = por %p327, %p328
      %p330 = scmp.ne.s32.totalorder %s322, %s324
      %p331 = scmp.eq.s32.totalorder %s31, 1
      %p332 = por %p330, %p331
      %p333 = scmp.ne.s32.totalorder %s324, %s325
      %p334 = scmp.eq.s32.totalorder %s31, 0
      %p335 = por %p333, %p334
      %p336 = scmp.ne.s32.totalorder %s324, %s325
      %p337 = scmp.eq.s32.totalorder %s32, 1
      %p338 = por %p336, %p337
      %p340 = scmp.ne.s32.totalorder %s325, %s339
      %p341 = scmp.eq.s32.totalorder %s32, 0
      %p342 = por %p340, %p341
      %s343 = ssub.s32 %s26, %s33
      %p344 = scmp.eq.s32.totalorder %s343, 0
      %s346 = sadd.s32 %s345, 1
      %s347 = scalar_select %p344, %s345, %s346
      %p350 = pneg %p344
      %p351 = scmp.eq.s32.totalorder %s26, 1
      %p352 = por %p350, %p351
      %p353 = scmp.ne.s32.totalorder %s345, %s348
      %p354 = scmp.eq.s32.totalorder %s26, 0
      %p355 = por %p353, %p354
      %p356 = scmp.ne.s32.totalorder %s345, %s348
      %p357 = scmp.eq.s32.totalorder %s31, 1
      %p358 = por %p356, %p357
      %p359 = scmp.ne.s32.totalorder %s348, %s349
      %p360 = scmp.eq.s32.totalorder %s31, 0
      %p361 = por %p359, %p360
      %p362 = scmp.ne.s32.totalorder %s348, %s349
      %p363 = scmp.eq.s32.totalorder %s32, 1
      %p364 = por %p362, %p363
      %p366 = scmp.ne.s32.totalorder %s349, %s365
      %p367 = scmp.eq.s32.totalorder %s32, 0
      %p368 = por %p366, %p367
      %s369 = ssub.s32 %s26, %s33
      %p370 = scmp.eq.s32.totalorder %s369, 0
      %s372 = sadd.s32 %s371, 1
      %s373 = scalar_select %p370, %s371, %s372
      %p376 = pneg %p370
      %p377 = scmp.eq.s32.totalorder %s26, 1
      %p378 = por %p376, %p377
      %p379 = scmp.ne.s32.totalorder %s371, %s374
      %p380 = scmp.eq.s32.totalorder %s26, 0
      %p381 = por %p379, %p380
      %p382 = scmp.ne.s32.totalorder %s371, %s374
      %p383 = scmp.eq.s32.totalorder %s31, 1
      %p384 = por %p382, %p383
      %p385 = scmp.ne.s32.totalorder %s374, %s375
      %p386 = scmp.eq.s32.totalorder %s31, 0
      %p387 = por %p385, %p386
      %p388 = scmp.ne.s32.totalorder %s374, %s375
      %p389 = scmp.eq.s32.totalorder %s32, 1
      %p390 = por %p388, %p389
      %p392 = scmp.ne.s32.totalorder %s375, %s391
      %p393 = scmp.eq.s32.totalorder %s32, 0
      %p394 = por %p392, %p393
      %s395 = ssub.s32 %s26, %s33
      %p396 = scmp.eq.s32.totalorder %s395, 0
      %s398 = sadd.s32 %s397, 1
      %s399 = scalar_select %p396, %s397, %s398
      %p402 = pneg %p396
      %p403 = scmp.eq.s32.totalorder %s26, 1
      %p404 = por %p402, %p403
      %p405 = scmp.ne.s32.totalorder %s397, %s400
      %p406 = scmp.eq.s32.totalorder %s26, 0
      %p407 = por %p405, %p406
      %p408 = scmp.ne.s32.totalorder %s397, %s400
      %p409 = scmp.eq.s32.totalorder %s31, 1
      %p410 = por %p408, %p409
      %p411 = scmp.ne.s32.totalorder %s400, %s401
      %p412 = scmp.eq.s32.totalorder %s31, 0
      %p413 = por %p411, %p412
      %p414 = scmp.ne.s32.totalorder %s400, %s401
      %p415 = scmp.eq.s32.totalorder %s32, 1
      %p416 = por %p414, %p415
      %p418 = scmp.ne.s32.totalorder %s401, %s417
      %p419 = scmp.eq.s32.totalorder %s32, 0
      %p420 = por %p418, %p419
      %p421 = scmp.le.s32.totalorder 1, %s26
      %p422 = scmp.lt.s32.totalorder %s26, 3
      %p423 = pnand %p421, %p422
      %p424 = pneg %p423
      // Predicated region
      $region9: #{pp_model_forward.1} parent=5 // pred_check
        _
      $region10: #{pp_model_forward.1} parent=5 // pred_check_branch
        %426 = sbr.rel (%p423) target = $region12
      $region11: #{pp_model_forward.1} parent=5 // pred_region
        %s427 = ssub.s32 %s26, 1
        // Predicated region
        $region13: #{pp_model_forward.1} parent=11 // pred_check
          %p428 = pneg %p125
        $region14: #{pp_model_forward.1} parent=11 // pred_check_branch
          %430 = sbr.rel (%p428) target = $region16
        $region15: #{pp_model_forward.1} parent=11 // pred_region
          _
        $region16: #{pp_model_forward.1} parent=11 // pred_fallthru
          _
        // Predicated region
        $region17: #{pp_model_forward.1} parent=11 // pred_check
          %p431 = pneg %p146
        $region18: #{pp_model_forward.1} parent=11 // pred_check_branch
          %433 = sbr.rel (%p431) target = $region20
        $region19: #{pp_model_forward.1} parent=11 // pred_region
          _
        $region20: #{pp_model_forward.1} parent=11 // pred_fallthru
          _
        // Predicated region
        $region21: #{pp_model_forward.1} parent=11 // pred_check
          %p434 = pneg %p167
        $region22: #{pp_model_forward.1} parent=11 // pred_check_branch
          %436 = sbr.rel (%p434) target = $region24
        $region23: #{pp_model_forward.1} parent=11 // pred_region
          _
        $region24: #{pp_model_forward.1} parent=11 // pred_fallthru
          _
        // Predicated region
        $region25: #{pp_model_forward.1} parent=11 // pred_check
          %p437 = pneg %p188
        $region26: #{pp_model_forward.1} parent=11 // pred_check_branch
          %439 = sbr.rel (%p437) target = $region28
        $region27: #{pp_model_forward.1} parent=11 // pred_region
          _
        $region28: #{pp_model_forward.1} parent=11 // pred_fallthru
          _
        // Predicated region
        $region29: #{pp_model_forward.1} parent=11 // pred_check
          %p440 = pneg %p209
        $region30: #{pp_model_forward.1} parent=11 // pred_check_branch
          %442 = sbr.rel (%p440) target = $region32
        $region31: #{pp_model_forward.1} parent=11 // pred_region
          _
        $region32: #{pp_model_forward.1} parent=11 // pred_fallthru
          _
        // Predicated region
        $region33: #{pp_model_forward.1} parent=11 // pred_check
          %p443 = pneg %p230
        $region34: #{pp_model_forward.1} parent=11 // pred_check_branch
          %445 = sbr.rel (%p443) target = $region36
        $region35: #{pp_model_forward.1} parent=11 // pred_region
          _
        $region36: #{pp_model_forward.1} parent=11 // pred_fallthru
          _
        // Predicated region
        $region37: #{pp_model_forward.1} parent=11 // pred_check
          %p446 = pneg %p251
        $region38: #{pp_model_forward.1} parent=11 // pred_check_branch
          %448 = sbr.rel (%p446) target = $region40
        $region39: #{pp_model_forward.1} parent=11 // pred_region
          _
        $region40: #{pp_model_forward.1} parent=11 // pred_fallthru
          _
        // Predicated region
        $region41: #{pp_model_forward.1} parent=11 // pred_check
          %p449 = pneg %p272
        $region42: #{pp_model_forward.1} parent=11 // pred_check_branch
          %451 = sbr.rel (%p449) target = $region44
        $region43: #{pp_model_forward.1} parent=11 // pred_region
          _
        $region44: #{pp_model_forward.1} parent=11 // pred_fallthru
          _
        // Predicated region
        $region45: #{pp_model_forward.1} parent=11 // pred_check
          %p452 = pneg %p293
        $region46: #{pp_model_forward.1} parent=11 // pred_check_branch
          %454 = sbr.rel (%p452) target = $region48
        $region47: #{pp_model_forward.1} parent=11 // pred_region
          _
        $region48: #{pp_model_forward.1} parent=11 // pred_fallthru
          _
        // Predicated region
        $region49: #{pp_model_forward.1} parent=11 // pred_check
          %p455 = pneg %p314
        $region50: #{pp_model_forward.1} parent=11 // pred_check_branch
          %457 = sbr.rel (%p455) target = $region52
        $region51: #{pp_model_forward.1} parent=11 // pred_region
          _
        $region52: #{pp_model_forward.1} parent=11 // pred_fallthru
          _
        // Predicated region
        $region53: #{pp_model_forward.1} parent=11 // pred_check
          %p458 = pneg %p335
        $region54: #{pp_model_forward.1} parent=11 // pred_check_branch
          %460 = sbr.rel (%p458) target = $region56
        $region55: #{pp_model_forward.1} parent=11 // pred_region
          _
        $region56: #{pp_model_forward.1} parent=11 // pred_fallthru
          _
      $region12: #{pp_model_forward.1} parent=5 // pred_fallthru
        _
      %p461 = scmp.lt.s32.totalorder %s26, 2
      // Predicated region
      $region57: #{pp_model_forward.1} parent=5 // pred_check
        %p462 = pneg %p461
      $region58: #{pp_model_forward.1} parent=5 // pred_check_branch
        %464 = sbr.rel (%p462) target = $region60
      $region59: #{pp_model_forward.1} parent=5 // pred_region
        // Predicated region
        $region61: #{pp_model_forward.1} parent=59 // pred_check
          %p465 = pneg %p46
        $region62: #{pp_model_forward.1} parent=59 // pred_check_branch
          %467 = sbr.rel (%p465) target = $region64
        $region63: #{pp_model_forward.1} parent=59 // pred_region
          %p468 = scmp.lt.s32.totalorder %s26, 1
          %s469 = scalar_select %p468, %s26, 1
          %s470 = scalar_lea.vmem %s0, %s469
        $region64: #{pp_model_forward.1} parent=59 // pred_fallthru
          _
        // Predicated region
        $region65: #{pp_model_forward.1} parent=59 // pred_check
          %p471 = pneg %p72
        $region66: #{pp_model_forward.1} parent=59 // pred_check_branch
          %473 = sbr.rel (%p471) target = $region68
        $region67: #{pp_model_forward.1} parent=59 // pred_region
          %p474 = scmp.lt.s32.totalorder %s26, 1
          %s475 = scalar_select %p474, %s26, 1
          %s476 = smul.addr %s475, 4
          %s477 = scalar_lea.vmem %s1, %s476
        $region68: #{pp_model_forward.1} parent=59 // pred_fallthru
          _
        // Predicated region
        $region69: #{pp_model_forward.1} parent=59 // pred_check
          %p478 = pneg %p98
        $region70: #{pp_model_forward.1} parent=59 // pred_check_branch
          %480 = sbr.rel (%p478) target = $region72
        $region71: #{pp_model_forward.1} parent=59 // pred_region
          %p481 = scmp.lt.s32.totalorder %s26, 1
          %s482 = scalar_select %p481, %s26, 1
          %s483 = smul.addr %s482, 8
          %s484 = scalar_lea.vmem %s2, %s483
        $region72: #{pp_model_forward.1} parent=59 // pred_fallthru
          _
      $region60: #{pp_model_forward.1} parent=5 // pred_fallthru
        _
      %p485 = scmp.le.s32.totalorder 1, %s26
      %p486 = scmp.lt.s32.totalorder %s26, 3
      %p487 = pnand %p485, %p486
      %p488 = pneg %p487
      // Predicated region
      $region73: #{pp_model_forward.1} parent=5 // pred_check
        _
      $region74: #{pp_model_forward.1} parent=5 // pred_check_branch
        %490 = sbr.rel (%p487) target = $region76
      $region75: #{pp_model_forward.1} parent=5 // pred_region
        %s491 = ssub.s32 %s26, 1
        %p492 = scmp.lt.s32.totalorder %s31, 1
        %s493 = scalar_select %p492, %s31, 1
        %s494 = scalar_lea.vmem %s0, %s493
        %p495 = pneg %p52
        %p496 = pneg %p49
        %p497 = scmp.lt.s32.totalorder %s31, 1
        %s498 = scalar_select %p497, %s31, 1
        %s499 = smul.addr %s498, 4
        %s500 = scalar_lea.vmem %s1, %s499
        %p501 = pneg %p78
        %p502 = pneg %p75
        %p503 = scmp.lt.s32.totalorder %s31, 1
        %s504 = scalar_select %p503, %s31, 1
        %s505 = smul.addr %s504, 8
        %s506 = scalar_lea.vmem %s2, %s505
        %p507 = pneg %p104
        %p508 = pneg %p101
        %p509 = pneg %p125
        %p510 = pneg %p122
        %p511 = pneg %p146
        %p512 = pneg %p143
        %p513 = pneg %p167
        %p514 = pneg %p164
        %p515 = pneg %p188
        %p516 = pneg %p185
        %p517 = pneg %p209
        %p518 = pneg %p206
        %p519 = pneg %p230
        %p520 = pneg %p227
        %p521 = pneg %p251
        %p522 = pneg %p248
        %p523 = pneg %p272
        %p524 = pneg %p269
        %p525 = pneg %p293
        %p526 = pneg %p290
        %p527 = pneg %p314
        %p528 = pneg %p311
        %p529 = pneg %p335
        %p530 = pneg %p332
        %p531 = pneg %p361
        %p532 = pneg %p358
        %p533 = scmp.lt.s32.totalorder %s31, 1
        %s534 = scalar_select %p533, %s31, 1
        %s535 = scalar_lea.vmem %s14, %s534
        %p536 = pneg %p387
        %p537 = pneg %p384
        %s538 = sand.u32 %s374, 1
        %s539 = scalar_lea.sflag [#allocation3], %s538
        %s540 = sand.u32 %s374, 1
        %s541 = smul.addr %s540, 8
        %s542 = scalar_lea.vmem [#allocation2], %s541
        %p543 = pneg %p413
        %p544 = pneg %p410
        %p545 = scmp.lt.s32.totalorder %s31, 1
        %s546 = scalar_select %p545, %s31, 1
        %s547 = smul.addr %s546, 2
        %s548 = smul.addr %s547, 8
        %s549 = scalar_lea.vmem %s16, %s548
        %p550 = scmp.lt.s32.totalorder %s31, 1
        %s551 = scalar_select %p550, %s31, 1
        %s552 = scalar_lea.vmem %s0, %s551
        %p553 = scmp.lt.s32.totalorder %s31, 1
        %s554 = scalar_select %p553, %s31, 1
        %s555 = smul.addr %s554, 4
        %s556 = scalar_lea.vmem %s1, %s555
        %p557 = scmp.lt.s32.totalorder %s31, 1
        %s558 = scalar_select %p557, %s31, 1
        %s559 = smul.addr %s558, 8
        %s560 = scalar_lea.vmem %s2, %s559
        %p561 = scmp.lt.s32.totalorder %s31, 1
        %s562 = scalar_select %p561, %s31, 1
        %s563 = scalar_lea.vmem %s14, %s562
        %p564 = scmp.lt.s32.totalorder %s31, 1
        %s565 = scalar_select %p564, %s31, 1
        %s566 = smul.addr %s565, 2
        %s567 = smul.addr %s566, 8
        %s568 = scalar_lea.vmem %s16, %s567
        %v570 = vld [vmem:[%s552] sm:$0x1]
        %v571 = vld [vmem:[%s3] sm:$0xf]
        %v572 = vld [vmem:[%s3 + $0x4] sm:$0x1]
        %v575 = vunpack.c.l.b16 %v571
        %v576 = vunpack.c.l.b16 %v572
        %v577 = vpack.c.b16 %v576, %v575
        %vm578 = vcmask 80896
        %v580 = vsel %vm578, %v570, 0
        %vm582 = vcmask 1044480
        %v584 = vsel %vm582, %v577, 0
        %586 = vmatprep.subr.bf16.mxu0 0
        %587 = vmatpush1.bf16.msra.mxu0 0
        %588 = vmatprep.subr.bf16.mxu0 0
        %589 = vmatpush1.bf16.msra.mxu0 0
        %590 = vmatprep.subr.bf16.mxu0 0
        %591 = vmatpush1.bf16.msra.mxu0 0
        %592 = vmatprep.subr.bf16.mxu0 0
        %593 = vmatpush1.bf16.msra.mxu0 0
        %594 = vmatprep.subr.bf16.mxu0 0
        %595 = vmatpush1.bf16.msra.mxu0 0
        %596 = vmatprep.subr.bf16.mxu0 0
        %597 = vmatpush1.bf16.msra.mxu0 0
        %598 = vmatprep.subr.bf16.mxu0 0
        %599 = vmatpush1.bf16.msra.mxu0 0
        %600 = vmatprep.subr.bf16.mxu0 0
        %601 = vmatpush1.bf16.msra.mxu0 %v584
        %602 = vmatprep.subr.bf16.mxu0 0
        %603 = vmatpush2.bf16.msra.mxu0 0
        %604 = vmatprep.subr.bf16.mxu0 0
        %605 = vmatpush2.bf16.msra.mxu0 0
        %606 = vmatprep.subr.bf16.mxu0 0
        %607 = vmatpush2.bf16.msra.mxu0 0
        %608 = vmatprep.subr.bf16.mxu0 0
        %609 = vmatpush2.bf16.msra.mxu0 0
        %610 = vmatprep.subr.bf16.mxu0 0
        %611 = vmatpush2.bf16.msra.mxu0 0
        %612 = vmatprep.subr.bf16.mxu0 0
        %613 = vmatpush2.bf16.msra.mxu0 0
        %614 = vmatprep.subr.bf16.mxu0 0
        %615 = vmatpush2.bf16.msra.mxu0 0
        %616 = vmatprep.subr.bf16.mxu0 0
        %617 = vmatpush2.bf16.msra.mxu0 0
        %618 = vmatprep.mubr.bf16.mxu0 0
        %619 = vmatmul.mubr.bf16.gmra.mxu0 %v580
        %v620 = vpop.f32.mrf.mxu0
        %v621 = vadd.f32 0.0, %v620
        %v622 = vpop.f32.mrf.mxu0
        %v623 = vpop.f32.mrf.mxu0
        %v624 = vpop.f32.mrf.mxu0
        %625 = vdwg.mxu0
        %v626 = vtanh.pop %v621
        %v627 = vpack.c.bf16 %v626, %v626
        %v628 = vld [vmem:[%s4] sm:$0xf]
        %v629 = vld [vmem:[%s4 + $0x4] sm:$0xf]
        %v630 = vld [vmem:[%s4 + $0x8] sm:$0xf]
        %v631 = vld [vmem:[%s4 + $0xc] sm:$0xf]
        %v632 = vld [vmem:[%s5] sm:$0xf]
        %v633 = vld [vmem:[%s5 + $0x4] sm:$0xf]
        %v634 = vld [vmem:[%s5 + $0x8] sm:$0xf]
        %v635 = vld [vmem:[%s5 + $0xc] sm:$0xf]
        %v637 = vshrl.u32 %v627, 16
        %v643 = vunpack.c.l.b16 %v632
        %v644 = vunpack.c.l.b16 %v633
        %v645 = vunpack.c.l.b16 %v634
        %v646 = vunpack.c.l.b16 %v635
        %v647 = vpack.c.b16 %v644, %v643
        %v648 = vpack.c.b16 %v646, %v645
        %vm651 = vcmask 261120
        %v653 = vsel %vm651, %v637, 0
        %655 = vmatprep.subr.bf16.mxu0 0
        %656 = vmatpush1.bf16.msra.mxu0 0
        %657 = vmatprep.subr.bf16.mxu0 0
        %658 = vmatpush1.bf16.msra.mxu0 0
        %659 = vmatprep.subr.bf16.mxu0 0
        %660 = vmatpush1.bf16.msra.mxu0 0
        %661 = vmatprep.subr.bf16.mxu0 0
        %662 = vmatpush1.bf16.msra.mxu0 0
        %663 = vmatprep.subr.bf16.mxu0 0
        %664 = vmatpush1.bf16.msra.mxu0 0
        %665 = vmatprep.subr.bf16.mxu0 0
        %666 = vmatpush1.bf16.msra.mxu0 0
        %667 = vmatprep.subr.bf16.mxu0 0
        %668 = vmatpush1.bf16.msra.mxu0 %v648
        %669 = vmatprep.subr.bf16.mxu0 0
        %670 = vmatpush1.bf16.msra.mxu0 %v647
        %671 = vmatprep.subr.bf16.mxu0 0
        %672 = vmatpush2.bf16.msra.mxu0 0
        %673 = vmatprep.subr.bf16.mxu0 0
        %674 = vmatpush2.bf16.msra.mxu0 0
        %675 = vmatprep.subr.bf16.mxu0 0
        %676 = vmatpush2.bf16.msra.mxu0 0
        %677 = vmatprep.subr.bf16.mxu0 0
        %678 = vmatpush2.bf16.msra.mxu0 0
        %679 = vmatprep.subr.bf16.mxu0 0
        %680 = vmatpush2.bf16.msra.mxu0 0
        %681 = vmatprep.subr.bf16.mxu0 0
        %682 = vmatpush2.bf16.msra.mxu0 0
        %683 = vmatprep.subr.bf16.mxu0 0
        %684 = vmatpush2.bf16.msra.mxu0 0
        %685 = vmatprep.subr.bf16.mxu0 0
        %686 = vmatpush2.bf16.msra.mxu0 0
        %687 = vmatprep.mubr.bf16.mxu0 0
        %688 = vmatmul.mubr.bf16.gmra.mxu0 %v653
        %v689 = vpop.f32.mrf.mxu0
        %v690 = vadd.f32 0.0, %v689
        %v691 = vpop.f32.mrf.mxu0
        %v692 = vpop.f32.mrf.mxu0
        %v693 = vpop.f32.mrf.mxu0
        %694 = vdwg.mxu0
        %v699 = vunpack.c.l.b16 %v628
        %v700 = vunpack.c.l.b16 %v629
        %v701 = vunpack.c.l.b16 %v630
        %v702 = vunpack.c.l.b16 %v631
        %v703 = vpack.c.b16 %v700, %v699
        %v704 = vpack.c.b16 %v702, %v701
        %v707 = vsel %vm651, %v627, 0
        %709 = vmatprep.subr.bf16.mxu0 0
        %710 = vmatpush1.bf16.msra.mxu0 0
        %711 = vmatprep.subr.bf16.mxu0 0
        %712 = vmatpush1.bf16.msra.mxu0 0
        %713 = vmatprep.subr.bf16.mxu0 0
        %714 = vmatpush1.bf16.msra.mxu0 0
        %715 = vmatprep.subr.bf16.mxu0 0
        %716 = vmatpush1.bf16.msra.mxu0 0
        %717 = vmatprep.subr.bf16.mxu0 0
        %718 = vmatpush1.bf16.msra.mxu0 0
        %719 = vmatprep.subr.bf16.mxu0 0
        %720 = vmatpush1.bf16.msra.mxu0 0
        %721 = vmatprep.subr.bf16.mxu0 0
        %722 = vmatpush1.bf16.msra.mxu0 %v704
        %723 = vmatprep.subr.bf16.mxu0 0
        %724 = vmatpush1.bf16.msra.mxu0 %v703
        %725 = vmatprep.subr.bf16.mxu0 0
        %726 = vmatpush2.bf16.msra.mxu0 0
        %727 = vmatprep.subr.bf16.mxu0 0
        %728 = vmatpush2.bf16.msra.mxu0 0
        %729 = vmatprep.subr.bf16.mxu0 0
        %730 = vmatpush2.bf16.msra.mxu0 0
        %731 = vmatprep.subr.bf16.mxu0 0
        %732 = vmatpush2.bf16.msra.mxu0 0
        %733 = vmatprep.subr.bf16.mxu0 0
        %734 = vmatpush2.bf16.msra.mxu0 0
        %735 = vmatprep.subr.bf16.mxu0 0
        %736 = vmatpush2.bf16.msra.mxu0 0
        %737 = vmatprep.subr.bf16.mxu0 0
        %738 = vmatpush2.bf16.msra.mxu0 0
        %739 = vmatprep.subr.bf16.mxu0 0
        %740 = vmatpush2.bf16.msra.mxu0 0
        %741 = vmatprep.mubr.bf16.mxu0 0
        %742 = vmatmul.mubr.bf16.gmra.mxu0 %v707
        %v743 = vpop.f32.mrf.mxu0
        %v744 = vadd.f32 %v690, %v743
        %v745 = vpop.f32.mrf.mxu0
        %v746 = vpop.f32.mrf.mxu0
        %v747 = vpop.f32.mrf.mxu0
        %748 = vdwg.mxu0
        %v749 = vld [vmem:[%s6] sm:$0x1]
        %v750 = vadd.f32 %v744, %v749
        %vm751 = vcmask 122880
        %752 = vst.msk [vmem:[%s563] sm:$0x1] %vm751, %v750
        %v753 = vmax.f32 %v750, 0.0
        %vm754 = vcmp.ne.f32.partialorder %v750, %v750
        %v755 = vadd.f32 %v750, 0.0
        %v756 = vand.u32 2147483647, %v750
        %v757 = vsub.f32 0.0, %v756
        %v758 = vmul.f32 %v757, 1.442695
        %v759 = vpow.pop %v758
        %v760 = vadd.f32 %v759, 1.0
        %v761 = vlog2.pop %v760
        %v762 = vmul.f32 %v761, 0.6931472
        %v763 = vmul.f32 -0.5, %v759
        %v764 = vadd.f32 %v763, 1.0
        %v765 = vmul.f32 %v764, %v759
        %v766 = vand.u32 2147483647, %v759
        %vm767 = vcmp.lt.f32.partialorder %v766, 0.0004427343
        %v768 = vsel %vm767, %v765, %v762
        %v769 = vadd.f32 %v753, %v768
        %v770 = vsel %vm754, %v755, %v769
        %vm771 = vcmask 254080
        %772 = vst.msk [vmem:[%s563] sm:$0x1] %vm771, %v770
        %v773 = vpack.c.bf16 %v750, %v750
        %v774 = vld [vmem:[%s8] sm:$0xf]
        %v775 = vld [vmem:[%s8 + $0x4] sm:$0xf]
        %v778 = vunpack.c.l.b16 %v774
        %v779 = vunpack.c.l.b16 %v775
        %v780 = vpack.c.b16 %v779, %v778
        %vm782 = vcmask 130048
        %v784 = vsel %vm782, %v773, 0
        %786 = vmatprep.subr.bf16.mxu0 0
        %787 = vmatpush1.bf16.msra.mxu0 0
        %788 = vmatprep.subr.bf16.mxu0 0
        %789 = vmatpush1.bf16.msra.mxu0 0
        %790 = vmatprep.subr.bf16.mxu0 0
        %791 = vmatpush1.bf16.msra.mxu0 0
        %792 = vmatprep.subr.bf16.mxu0 0
        %793 = vmatpush1.bf16.msra.mxu0 0
        %794 = vmatprep.subr.bf16.mxu0 0
        %795 = vmatpush1.bf16.msra.mxu0 0
        %796 = vmatprep.subr.bf16.mxu0 0
        %797 = vmatpush1.bf16.msra.mxu0 0
        %798 = vmatprep.subr.bf16.mxu0 0
        %799 = vmatpush1.bf16.msra.mxu0 0
        %800 = vmatprep.subr.bf16.mxu0 0
        %801 = vmatpush1.bf16.msra.mxu0 %v780
        %802 = vmatprep.subr.bf16.mxu0 0
        %803 = vmatpush2.bf16.msra.mxu0 0
        %804 = vmatprep.subr.bf16.mxu0 0
        %805 = vmatpush2.bf16.msra.mxu0 0
        %806 = vmatprep.subr.bf16.mxu0 0
        %807 = vmatpush2.bf16.msra.mxu0 0
        %808 = vmatprep.subr.bf16.mxu0 0
        %809 = vmatpush2.bf16.msra.mxu0 0
        %810 = vmatprep.subr.bf16.mxu0 0
        %811 = vmatpush2.bf16.msra.mxu0 0
        %812 = vmatprep.subr.bf16.mxu0 0
        %813 = vmatpush2.bf16.msra.mxu0 0
        %814 = vmatprep.subr.bf16.mxu0 0
        %815 = vmatpush2.bf16.msra.mxu0 0
        %816 = vmatprep.subr.bf16.mxu0 0
        %817 = vmatpush2.bf16.msra.mxu0 0
        %818 = vmatprep.mubr.bf16.mxu0 0
        %819 = vmatmul.mubr.bf16.gmra.mxu0 %v784
        %v820 = vpop.f32.mrf.mxu0
        %v821 = vadd.f32 0.0, %v820
        %v822 = vpop.f32.mrf.mxu0
        %v823 = vpop.f32.mrf.mxu0
        %v824 = vpop.f32.mrf.mxu0
        %825 = vdwg.mxu0
        %v826 = vld [vmem:[%s556] sm:$0xf]
        %v827 = vld [vmem:[%s7] sm:$0xf]
        %v828 = vld [vmem:[%s7 + $0x4] sm:$0x1]
        %v829 = vlaneseq
        %v830 = vshrl.u32 %v829, 7
        %v831 = vsub.s32 0, %v830
        %v832 = vrot.slane %v821, %v831
        %v835 = vunpack.c.l.b16 %v827
        %v836 = vunpack.c.l.b16 %v828
        %v837 = vpack.c.b16 %v836, %v835
        %v839 = vsel %vm578, %v826, 0
        %v842 = vsel %vm582, %v837, 0
        %844 = vmatprep.subr.bf16.mxu0 0
        %845 = vmatpush1.bf16.msra.mxu0 0
        %846 = vmatprep.subr.bf16.mxu0 0
        %847 = vmatpush1.bf16.msra.mxu0 0
        %848 = vmatprep.subr.bf16.mxu0 0
        %849 = vmatpush1.bf16.msra.mxu0 0
        %850 = vmatprep.subr.bf16.mxu0 0
        %851 = vmatpush1.bf16.msra.mxu0 0
        %852 = vmatprep.subr.bf16.mxu0 0
        %853 = vmatpush1.bf16.msra.mxu0 0
        %854 = vmatprep.subr.bf16.mxu0 0
        %855 = vmatpush1.bf16.msra.mxu0 0
        %856 = vmatprep.subr.bf16.mxu0 0
        %857 = vmatpush1.bf16.msra.mxu0 0
        %858 = vmatprep.subr.bf16.mxu0 0
        %859 = vmatpush1.bf16.msra.mxu0 %v842
        %860 = vmatprep.subr.bf16.mxu0 0
        %861 = vmatpush2.bf16.msra.mxu0 0
        %862 = vmatprep.subr.bf16.mxu0 0
        %863 = vmatpush2.bf16.msra.mxu0 0
        %864 = vmatprep.subr.bf16.mxu0 0
        %865 = vmatpush2.bf16.msra.mxu0 0
        %866 = vmatprep.subr.bf16.mxu0 0
        %867 = vmatpush2.bf16.msra.mxu0 0
        %868 = vmatprep.subr.bf16.mxu0 0
        %869 = vmatpush2.bf16.msra.mxu0 0
        %870 = vmatprep.subr.bf16.mxu0 0
        %871 = vmatpush2.bf16.msra.mxu0 0
        %872 = vmatprep.subr.bf16.mxu0 0
        %873 = vmatpush2.bf16.msra.mxu0 0
        %874 = vmatprep.subr.bf16.mxu0 0
        %875 = vmatpush2.bf16.msra.mxu0 0
        %876 = vmatprep.mubr.bf16.mxu0 0
        %877 = vmatmul.mubr.bf16.gmra.mxu0 %v839
        %v878 = vpop.f32.mrf.mxu0
        %v879 = vadd.f32 %v832, %v878
        %v880 = vpop.f32.mrf.mxu0
        %v881 = vpop.f32.mrf.mxu0
        %v882 = vpop.f32.mrf.mxu0
        %883 = vdwg.mxu0
        %v884 = vtanh.pop %v879
        %885 = vst.msk [vmem:[%s542] sm:$0xff] %vm651, %v884
        %v886 = vld [vmem:[%s10] sm:$0xf]
        %v887 = vld [vmem:[%s10 + $0x4] sm:$0xf]
        %v890 = vunpack.c.l.b16 %v886
        %v891 = vunpack.c.l.b16 %v887
        %v892 = vpack.c.b16 %v891, %v890
        %894 = vmatprep.subr.bf16.mxu0 0
        %895 = vmatpush1.bf16.msra.mxu0 0
        %896 = vmatprep.subr.bf16.mxu0 0
        %897 = vmatpush1.bf16.msra.mxu0 0
        %898 = vmatprep.subr.bf16.mxu0 0
        %899 = vmatpush1.bf16.msra.mxu0 0
        %900 = vmatprep.subr.bf16.mxu0 0
        %901 = vmatpush1.bf16.msra.mxu0 0
        %902 = vmatprep.subr.bf16.mxu0 0
        %903 = vmatpush1.bf16.msra.mxu0 0
        %904 = vmatprep.subr.bf16.mxu0 0
        %905 = vmatpush1.bf16.msra.mxu0 0
        %906 = vmatprep.subr.bf16.mxu0 0
        %907 = vmatpush1.bf16.msra.mxu0 0
        %908 = vmatprep.subr.bf16.mxu0 0
        %909 = vmatpush1.bf16.msra.mxu0 %v892
        %910 = vmatprep.subr.bf16.mxu0 0
        %911 = vmatpush2.bf16.msra.mxu0 0
        %912 = vmatprep.subr.bf16.mxu0 0
        %913 = vmatpush2.bf16.msra.mxu0 0
        %914 = vmatprep.subr.bf16.mxu0 0
        %915 = vmatpush2.bf16.msra.mxu0 0
        %916 = vmatprep.subr.bf16.mxu0 0
        %917 = vmatpush2.bf16.msra.mxu0 0
        %918 = vmatprep.subr.bf16.mxu0 0
        %919 = vmatpush2.bf16.msra.mxu0 0
        %920 = vmatprep.subr.bf16.mxu0 0
        %921 = vmatpush2.bf16.msra.mxu0 0
        %922 = vmatprep.subr.bf16.mxu0 0
        %923 = vmatpush2.bf16.msra.mxu0 0
        %924 = vmatprep.subr.bf16.mxu0 0
        %925 = vmatpush2.bf16.msra.mxu0 0
        %926 = vmatprep.mubr.bf16.mxu0 0
        %927 = vmatmul.mubr.bf16.gmra.mxu0 %v784
        %v928 = vpop.f32.mrf.mxu0
        %v929 = vadd.f32 0.0, %v928
        %v930 = vpop.f32.mrf.mxu0
        %v931 = vpop.f32.mrf.mxu0
        %v932 = vpop.f32.mrf.mxu0
        %933 = vdwg.mxu0
        %v934 = vpack.c.bf16 %v884, %v884
        %v935 = vld [vmem:[%s9] sm:$0xf]
        %v936 = vld [vmem:[%s9 + $0x4] sm:$0xf]
        %v937 = vld [vmem:[%s9 + $0x8] sm:$0xf]
        %v938 = vld [vmem:[%s9 + $0xc] sm:$0xf]
        %v939 = vlaneseq
        %v940 = vshrl.u32 %v939, 7
        %v941 = vsub.s32 0, %v940
        %v942 = vrot.slane %v929, %v941
        %v947 = vunpack.c.l.b16 %v935
        %v948 = vunpack.c.l.b16 %v936
        %v949 = vunpack.c.l.b16 %v937
        %v950 = vunpack.c.l.b16 %v938
        %v951 = vpack.c.b16 %v948, %v947
        %v952 = vpack.c.b16 %v950, %v949
        %v956 = vsel %vm651, %v934, 0
        %958 = vmatprep.subr.bf16.mxu0 0
        %959 = vmatpush1.bf16.msra.mxu0 0
        %960 = vmatprep.subr.bf16.mxu0 0
        %961 = vmatpush1.bf16.msra.mxu0 0
        %962 = vmatprep.subr.bf16.mxu0 0
        %963 = vmatpush1.bf16.msra.mxu0 0
        %964 = vmatprep.subr.bf16.mxu0 0
        %965 = vmatpush1.bf16.msra.mxu0 0
        %966 = vmatprep.subr.bf16.mxu0 0
        %967 = vmatpush1.bf16.msra.mxu0 0
        %968 = vmatprep.subr.bf16.mxu0 0
        %969 = vmatpush1.bf16.msra.mxu0 0
        %970 = vmatprep.subr.bf16.mxu0 0
        %971 = vmatpush1.bf16.msra.mxu0 %v952
        %972 = vmatprep.subr.bf16.mxu0 0
        %973 = vmatpush1.bf16.msra.mxu0 %v951
        %974 = vmatprep.subr.bf16.mxu0 0
        %975 = vmatpush2.bf16.msra.mxu0 0
        %976 = vmatprep.subr.bf16.mxu0 0
        %977 = vmatpush2.bf16.msra.mxu0 0
        %978 = vmatprep.subr.bf16.mxu0 0
        %979 = vmatpush2.bf16.msra.mxu0 0
        %980 = vmatprep.subr.bf16.mxu0 0
        %981 = vmatpush2.bf16.msra.mxu0 0
        %982 = vmatprep.subr.bf16.mxu0 0
        %983 = vmatpush2.bf16.msra.mxu0 0
        %984 = vmatprep.subr.bf16.mxu0 0
        %985 = vmatpush2.bf16.msra.mxu0 0
        %986 = vmatprep.subr.bf16.mxu0 0
        %987 = vmatpush2.bf16.msra.mxu0 0
        %988 = vmatprep.subr.bf16.mxu0 0
        %989 = vmatpush2.bf16.msra.mxu0 0
        %990 = vmatprep.mubr.bf16.mxu0 0
        %991 = vmatmul.mubr.bf16.gmra.mxu0 %v956
        %v992 = vpop.f32.mrf.mxu0
        %v993 = vadd.f32 %v942, %v992
        %v994 = vpop.f32.mrf.mxu0
        %v995 = vpop.f32.mrf.mxu0
        %v996 = vpop.f32.mrf.mxu0
        %997 = vdwg.mxu0
        %v998 = vld [vmem:[%s11] sm:$0x1]
        %v999 = vlaneseq
        %v1000 = vshrl.u32 %v999, 7
        %v1001 = vsub.s32 0, %v1000
        %v1002 = vrot.slane %v998, %v1001
        %v1003 = vadd.f32 %v993, %v1002
        %v1004 = vtanh.pop %v1003
        %v1005 = vld [vmem:[%s560] sm:$0xff]
        %v1006 = vld [vmem:[%s11 + $0x1] sm:$0x1]
        %1008 = vset.pattern.permute.xlu0 0
        %1009 = vperm.xlu0 %1008, %v1005
        %v1010 = vpop.permute.xlu0 %1009
        %v1012 = vlaneseq
        %v1013 = vshrl.u32 %v1012, 7
        %v1014 = vsub.s32 0, %v1013
        %v1015 = vrot.slane %v1006, %v1014
        %v1016 = vmul.f32 %v1010, %v1015
        %v1017 = vadd.f32 %v1003, %v1016
        %v1018 = vtanh.pop %v1017
        %v1019 = vpack.c.bf16 %v1018, %v1004
        %v1020 = vld [vmem:[%s12] sm:$0xf]
        %v1021 = vld [vmem:[%s12 + $0x4] sm:$0xf]
        %v1022 = vld [vmem:[%s12 + $0x8] sm:$0xf]
        %v1023 = vld [vmem:[%s12 + $0xc] sm:$0xf]
        %v1024 = vld [vmem:[%s13] sm:$0x1]
        %v1026 = vlaneseq
        %v1027 = vshrl.u32 %v1026, 7
        %v1028 = vsub.s32 0, %v1027
        %v1029 = vrot.slane %v1024, %v1028
        %v1035 = vunpack.c.l.b16 %v1020
        %v1036 = vunpack.c.l.b16 %v1021
        %v1037 = vunpack.c.l.b16 %v1022
        %v1038 = vunpack.c.l.b16 %v1023
        %v1039 = vpack.c.b16 %v1036, %v1035
        %v1040 = vpack.c.b16 %v1038, %v1037
        %v1044 = vsel %vm651, %v1019, 0
        %1046 = vmatprep.subr.bf16.mxu0 0
        %1047 = vmatpush1.bf16.msra.mxu0 0
        %1048 = vmatprep.subr.bf16.mxu0 0
        %1049 = vmatpush1.bf16.msra.mxu0 0
        %1050 = vmatprep.subr.bf16.mxu0 0
        %1051 = vmatpush1.bf16.msra.mxu0 0
        %1052 = vmatprep.subr.bf16.mxu0 0
        %1053 = vmatpush1.bf16.msra.mxu0 0
        %1054 = vmatprep.subr.bf16.mxu0 0
        %1055 = vmatpush1.bf16.msra.mxu0 0
        %1056 = vmatprep.subr.bf16.mxu0 0
        %1057 = vmatpush1.bf16.msra.mxu0 0
        %1058 = vmatprep.subr.bf16.mxu0 0
        %1059 = vmatpush1.bf16.msra.mxu0 %v1040
        %1060 = vmatprep.subr.bf16.mxu0 0
        %1061 = vmatpush1.bf16.msra.mxu0 %v1039
        %1062 = vmatprep.subr.bf16.mxu0 0
        %1063 = vmatpush2.bf16.msra.mxu0 0
        %1064 = vmatprep.subr.bf16.mxu0 0
        %1065 = vmatpush2.bf16.msra.mxu0 0
        %1066 = vmatprep.subr.bf16.mxu0 0
        %1067 = vmatpush2.bf16.msra.mxu0 0
        %1068 = vmatprep.subr.bf16.mxu0 0
        %1069 = vmatpush2.bf16.msra.mxu0 0
        %1070 = vmatprep.subr.bf16.mxu0 0
        %1071 = vmatpush2.bf16.msra.mxu0 0
        %1072 = vmatprep.subr.bf16.mxu0 0
        %1073 = vmatpush2.bf16.msra.mxu0 0
        %1074 = vmatprep.subr.bf16.mxu0 0
        %1075 = vmatpush2.bf16.msra.mxu0 0
        %1076 = vmatprep.subr.bf16.mxu0 0
        %1077 = vmatpush2.bf16.msra.mxu0 0
        %1078 = vmatprep.mubr.bf16.mxu0 0
        %1079 = vmatmul.mubr.bf16.gmra.mxu0 %v1044
        %v1080 = vpop.f32.mrf.mxu0
        %v1081 = vadd.f32 %v1029, %v1080
        %v1082 = vpop.f32.mrf.mxu0
        %v1083 = vpop.f32.mrf.mxu0
        %v1084 = vadd.f32 %v1029, %v1083
        %v1085 = vpop.f32.mrf.mxu0
        %1086 = vdwg.mxu0
        %v1087 = vmax.f32 %v1081, 0.0
        %v1088 = vmax.f32 %v1084, 0.0
        %vm1089 = vcmp.ne.f32.partialorder %v1081, %v1081
        %vm1090 = vcmp.ne.f32.partialorder %v1084, %v1084
        %v1091 = vadd.f32 %v1081, 0.0
        %v1092 = vadd.f32 %v1084, 0.0
        %v1093 = vand.u32 2147483647, %v1081
        %v1094 = vand.u32 2147483647, %v1084
        %v1095 = vsub.f32 0.0, %v1093
        %v1096 = vsub.f32 0.0, %v1094
        %v1097 = vmul.f32 %v1095, 1.442695
        %v1098 = vpow.pop %v1097
        %v1099 = vmul.f32 %v1096, 1.442695
        %v1100 = vpow.pop %v1099
        %v1101 = vadd.f32 %v1098, 1.0
        %v1102 = vlog2.pop %v1101
        %v1103 = vmul.f32 %v1102, 0.6931472
        %v1104 = vmul.f32 -0.5, %v1098
        %v1105 = vadd.f32 %v1104, 1.0
        %v1106 = vmul.f32 %v1105, %v1098
        %v1107 = vand.u32 2147483647, %v1098
        %vm1108 = vcmp.lt.f32.partialorder %v1107, 0.0004427343
        %v1109 = vsel %vm1108, %v1106, %v1103
        %v1110 = vadd.f32 %v1100, 1.0
        %v1111 = vlog2.pop %v1110
        %v1112 = vmul.f32 %v1111, 0.6931472
        %v1113 = vmul.f32 -0.5, %v1100
        %v1114 = vadd.f32 %v1113, 1.0
        %v1115 = vmul.f32 %v1114, %v1100
        %v1116 = vand.u32 2147483647, %v1100
        %vm1117 = vcmp.lt.f32.partialorder %v1116, 0.0004427343
        %v1118 = vsel %vm1117, %v1115, %v1112
        %v1119 = vadd.f32 %v1087, %v1109
        %v1120 = vadd.f32 %v1088, %v1118
        %v1121 = vsel %vm1089, %v1091, %v1119
        %v1122 = vsel %vm1090, %v1092, %v1120
        %vm1123 = vcmp.lt.f32.partialorder %v1081, -20.0
        %vm1124 = vcmp.lt.f32.partialorder %v1084, -20.0
        %v1125 = vmax.f32 %v1121, 1e-30
        %v1126 = vmax.f32 %v1122, 1e-30
        %v1127 = vlog2.pop %v1125
        %v1128 = vmul.f32 %v1127, 0.6931472
        %v1129 = vlog2.pop %v1126
        %v1130 = vmul.f32 %v1129, 0.6931472
        %v1131 = vsel %vm1123, %v1081, %v1128
        %v1132 = vsel %vm1124, %v1084, %v1130
        %vm1133 = vcmask 48128
        %1134 = vst.msk [vmem:[%s568] sm:$0xff] %vm1133, %v1131
        %1135 = vst.msk [vmem:[%s568 + $0x8] sm:$0xff] %vm1133, %v1132
        %v1136 = vsel %vm1133, %v1121, 0.0
        %1137 = vadd.xlane.f32.xlu0 %v1136
        %v1138 = vpop.xlane.xlu0 %1137
        %v1139 = vsel %vm1133, %v1122, 0.0
        %1140 = vadd.xlane.f32.xlu0 %v1139
        %v1141 = vpop.xlane.xlu0 %1140
        %vm1142 = vcmask 56368
        %1143 = vst.msk [vmem:[%s568] sm:$0xff] %vm1142, %v1138
        %1144 = vst.msk [vmem:[%s568 + $0x8] sm:$0xff] %vm1142, %v1141
        %p1145 = scmp.lt.s32.totalorder %s31, 1
        %s1146 = scalar_select %p1145, %s31, 1
        %s1147 = scalar_lea.vmem %s14, %s1146
        %s1148 = sand.u32 %s374, 1
        %s1149 = scalar_lea.sflag [#allocation3], %s1148
        %s1150 = sand.u32 %s374, 1
        %s1151 = smul.addr %s1150, 8
        %s1152 = scalar_lea.vmem [#allocation2], %s1151
        %p1153 = scmp.lt.s32.totalorder %s31, 1
        %s1154 = scalar_select %p1153, %s31, 1
        %s1155 = smul.addr %s1154, 2
        %s1156 = smul.addr %s1155, 8
        %s1157 = scalar_lea.vmem %s16, %s1156
        // Predicated region
        $region77: #{pp_model_forward.1} parent=75 // pred_check
          %p1158 = pneg %p358
        $region78: #{pp_model_forward.1} parent=75 // pred_check_branch
          %1160 = sbr.rel (%p1158) target = $region80
        $region79: #{pp_model_forward.1} parent=75 // pred_region
          _
        $region80: #{pp_model_forward.1} parent=75 // pred_fallthru
          _
        // Predicated region
        $region81: #{pp_model_forward.1} parent=75 // pred_check
          %p1161 = pneg %p384
        $region82: #{pp_model_forward.1} parent=75 // pred_check_branch
          %1163 = sbr.rel (%p1161) target = $region84
        $region83: #{pp_model_forward.1} parent=75 // pred_region
          %s1165 = ssub.s32 128, 128
          %1166 = vsyncadd %s1149, %s1165
          %s1167 = smul.addr %s31, 128
          %s1168 = scalar_lea.hbm %s15, %s1167
          %s1170 = sshll.u32 %s1152, 4
          %s1171 = int_to_ptr.vmem [resolvable:$true] %s1170
          %1173 = dma.vmem_to_hbm [thread:$0]  %s1171, 128, %s1168, %s1149
        $region84: #{pp_model_forward.1} parent=75 // pred_fallthru
          _
        // Predicated region
        $region85: #{pp_model_forward.1} parent=75 // pred_check
          %p1174 = pneg %p410
        $region86: #{pp_model_forward.1} parent=75 // pred_check_branch
          %1176 = sbr.rel (%p1174) target = $region88
        $region87: #{pp_model_forward.1} parent=75 // pred_region
          _
        $region88: #{pp_model_forward.1} parent=75 // pred_fallthru
          _
      $region76: #{pp_model_forward.1} parent=5 // pred_fallthru
        _
      %p1177 = scmp.le.s32.totalorder 2, %s26
      // Predicated region
      $region89: #{pp_model_forward.1} parent=5 // pred_check
        %p1178 = pneg %p1177
      $region90: #{pp_model_forward.1} parent=5 // pred_check_branch
        %1180 = sbr.rel (%p1178) target = $region92
      $region91: #{pp_model_forward.1} parent=5 // pred_region
        %s1181 = ssub.s32 %s26, 2
        // Predicated region
        $region93: #{pp_model_forward.1} parent=91 // pred_check
          %p1182 = pneg %p364
        $region94: #{pp_model_forward.1} parent=91 // pred_check_branch
          %1184 = sbr.rel (%p1182) target = $region96
        $region95: #{pp_model_forward.1} parent=91 // pred_region
          %p1185 = scmp.lt.s32.totalorder %s32, 1
          %s1186 = scalar_select %p1185, %s32, 1
          %s1187 = scalar_lea.vmem %s14, %s1186
        $region96: #{pp_model_forward.1} parent=91 // pred_fallthru
          _
        // Predicated region
        $region97: #{pp_model_forward.1} parent=91 // pred_check
          %p1188 = pneg %p390
        $region98: #{pp_model_forward.1} parent=91 // pred_check_branch
          %1190 = sbr.rel (%p1188) target = $region100
        $region99: #{pp_model_forward.1} parent=91 // pred_region
          %s1191 = sand.u32 %s375, 1
          %s1192 = scalar_lea.sflag [#allocation3], %s1191
          %s1193 = sand.u32 %s375, 1
          %s1194 = smul.addr %s1193, 8
          %s1195 = scalar_lea.vmem [#allocation2], %s1194
          %1196 = dma.done %s1192, 128
        $region100: #{pp_model_forward.1} parent=91 // pred_fallthru
          _
        // Predicated region
        $region101: #{pp_model_forward.1} parent=91 // pred_check
          %p1197 = pneg %p416
        $region102: #{pp_model_forward.1} parent=91 // pred_check_branch
          %1199 = sbr.rel (%p1197) target = $region104
        $region103: #{pp_model_forward.1} parent=91 // pred_region
          %p1200 = scmp.lt.s32.totalorder %s32, 1
          %s1201 = scalar_select %p1200, %s32, 1
          %s1202 = smul.addr %s1201, 2
          %s1203 = smul.addr %s1202, 8
          %s1204 = scalar_lea.vmem %s16, %s1203
        $region104: #{pp_model_forward.1} parent=91 // pred_fallthru
          _
      $region92: #{pp_model_forward.1} parent=5 // pred_fallthru
        _
    $region6: #{pp_model_forward.1} parent=1 // loop_footer
      %s30 = sadd.s32 1, %s26
    $region7: #{pp_model_forward.1} parent=1 // loop_footer_branch
      %25 = sbr.rel target = $region3
    $region8: #{pp_model_forward.1} parent=1 // loop_exit
      _
    %1205 = vsyncpa [#allocation3], 1
    %s1206 = scalar_lea.sflag [#allocation3], 1
    %1207 = vsyncpa %s1206, 1

</llo_original>
